<compile_context>
chip_gen: v7x
topology: tpu7x:2x2x1
jax: 0.10.0
libtpu: 0.0.40
codegen_flags: <defaults>
</compile_context>

<pallas_src>
import functools

import jax
import jax.numpy as jnp
from jax.experimental import pallas as pl
from jax.experimental.pallas import tpu as pltpu


def _attention_kernel(x_q_ref, x_kv_ref, wq_ref, wk_ref, wv_ref, wout_ref, bout_ref,
                      w1_ref, w2_ref, o_ref, k_scr, vm_scr, *, heads, dim_head):
    qi = pl.program_id(1)
    n = x_kv_ref.shape[0]

    # --- Per-batch stage: K^T cache and w2/Wout-folded V~ cache (resident across query tiles). ---
    @pl.when(qi == 0)
    def _():
        xk = x_kv_ref[...]                                              # (N, D) bf16
        # K^T: one wide matmul, contraction over D, output lane-dense in N.
        k_t = jnp.einsum('id,nd->in', wk_ref[...], xk,
                         preferred_element_type=jnp.float32)            # (inner, N) f32
        k_scr[...] = k_t.reshape(heads, dim_head, n).astype(jnp.bfloat16)
        # V: one wide matmul (head-major columns).
        v_full = jnp.dot(xk, wv_ref[...],
                         preferred_element_type=jnp.float32)            # (N, inner) f32
        # Fold talking_heads2 + Wout:  V~_h = sum_g w2[g,h] * (v_g @ WoutT_g)   (once per batch)
        vw = [jnp.dot(v_full[:, g * dim_head:(g + 1) * dim_head].astype(jnp.bfloat16),
                      wout_ref[g], preferred_element_type=jnp.float32)
              for g in range(heads)]                                    # heads x (N, D) f32
        for h in range(heads):
            acc = w2_ref[0, h] * vw[0]
            for g in range(1, heads):
                acc = acc + w2_ref[g, h] * vw[g]
            vm_scr[h] = acc.astype(jnp.bfloat16)

    # --- Per query tile: Q projection (wide matmul, scale folded into Wq host-side). ---
    xq = x_q_ref[...]                                                   # (tq, D) bf16
    q_full = jnp.dot(xq, wq_ref[...], preferred_element_type=jnp.float32)   # (tq, inner) f32

    # Scores per head in canonical (tq, d) @ (d, N) form against the transposed K cache.
    dots = [jnp.dot(q_full[:, h * dim_head:(h + 1) * dim_head].astype(jnp.bfloat16),
                    k_scr[h], preferred_element_type=jnp.float32)
            for h in range(heads)]                                      # heads x (tq, N) f32

    # Mix-1 (talking_heads1, scalars from SMEM) fused with softmax, then attn @ V~ accumulation.
    tq = x_q_ref.shape[0]
    d_out = o_ref.shape[-1]
    y = jnp.zeros((tq, d_out), jnp.float32)
    for g in range(heads):
        mixed = w1_ref[g, 0] * dots[0]
        for h in range(1, heads):
            mixed = mixed + w1_ref[g, h] * dots[h]
        m = jnp.max(mixed, axis=-1, keepdims=True)
        e = jnp.exp(mixed - m)
        inv = pl.reciprocal(jnp.sum(e, axis=-1, keepdims=True), approx=True)
        attn_g = e * inv
        # dropout(p=0.0) -> identity; mix-2 + Wout already folded into vm_scr.
        y = y + jnp.dot(attn_g.astype(jnp.bfloat16), vm_scr[g],
                        preferred_element_type=jnp.float32)             # (tq, D)
    o_ref[...] = (y + bout_ref[...]).astype(o_ref.dtype)


def _plan_tiles(n, d, heads, dim_head, out_itemsize, query_tile=None, vmem_limit_bytes=None):
    """Pick the query tile from the real resident set and derive a safe vmem_limit_bytes."""
    inner = heads * dim_head
    pad = lambda v, m: -(-v // m) * m
    try:
        cap = int(pltpu.get_tpu_info().vmem_capacity_bytes)
    except Exception:
        cap = 128 << 20
    hard_cap = int(cap * 3 // 4)          # headroom (48 MiB on v7x's 64 MiB, 96 MiB on 128 MiB parts)
    budget = min(int(vmem_limit_bytes), hard_cap) if vmem_limit_bytes else hard_cap

    # tq-independent residents.
    k_scr = heads * pad(dim_head, 16) * pad(n, 128) * 2                 # bf16 K^T cache
    vm_scr = heads * pad(n, 16) * pad(d, 128) * 2                       # bf16 V~ cache
    xkv = 2 * pad(n, 16) * pad(d, 128) * 2                              # double-buffered x_kv block
    wts = 2 * 2 * (4 * inner * d) + 2 * 4 * pad(d, 128)                 # bf16 weights (dbl-buffered) + bias
    fixed = k_scr + vm_scr + xkv + wts

    def need(tq):
        scores = (heads + 3) * tq * pad(n, 128) * 4                     # live f32 (tq, N) strips
        qtmp = tq * pad(inner, 128) * 6                                 # q_full f32 + bf16 slices
        io = 2 * tq * pad(d, 128) * (2 + out_itemsize) + tq * pad(d, 128) * 4
        return fixed + scores + qtmp + io

    if query_tile is not None:
        tq = max(1, min(int(query_tile), n))
    elif n <= 256:
        tq = n
    else:
        tq = 8
        cand = 16
        while cand <= min(n, 1024) and need(cand) <= budget:
            tq = cand
            cand += 8
    if tq < n:
        tq = max(8, (tq // 8) * 8)        # keep the (8, 128) BlockSpec constraint on partial tiles
    limit = budget if vmem_limit_bytes else min(hard_cap, max(need(tq) + (4 << 20), 32 << 20))
    return tq, int(limit)


def attention_forward(x, wqkv, wout, bout, w1, w2, *, heads, dim_head,
                      query_tile=None, vmem_limit_bytes=None):
    """Forward pass of Attention (talk_heads=True, dropout=0), PyTorch weight layouts.

    x:    (B, N, D)
    wqkv: (3*inner, D)   = to_qkv.weight
    wout: (D, inner)     = to_out[0].weight
    bout: (D,)           = to_out[0].bias
    w1, w2: (heads, heads) = talking_heads{1,2}.weight[:, :, 0, 0]
    """
    B, N, D = x.shape
    inner = heads * dim_head
    scale = float(dim_head) ** -0.5
    assert wqkv.shape == (3 * inner, D) and wout.shape == (D, inner)

    # Host-side layout plumbing: split qkv, fold the softmax scale into Wq, build wide slabs,
    # cast MXU weights and x to bf16 (f32 accumulation in-kernel).
    wq, wk, wv = jnp.split(wqkv, 3, axis=0)                            # each (inner, D)
    wq_wide = (wq * scale).T.astype(jnp.bfloat16)                      # (D, inner), head-major cols
    wk_mat = wk.astype(jnp.bfloat16)                                   # (inner, D) for the K^T einsum
    wv_wide = wv.T.astype(jnp.bfloat16)                                # (D, inner)
    wout_h = wout.T.reshape(heads, dim_head, D).astype(jnp.bfloat16)   # per-head (dim_head, D) slabs
    bout_2d = bout.reshape(1, D).astype(jnp.float32)
    w1 = w1.astype(jnp.float32)
    w2 = w2.astype(jnp.float32)
    x_bf = x.astype(jnp.bfloat16)                                      # halve x HBM->VMEM DMA bytes

    tq, vmem_limit = _plan_tiles(N, D, heads, dim_head, jnp.dtype(x.dtype).itemsize,
                                 query_tile, vmem_limit_bytes)
    nq = pl.cdiv(N, tq)

    kernel = functools.partial(_attention_kernel, heads=heads, dim_head=dim_head)
    return pl.pallas_call(
        kernel,
        out_shape=jax.ShapeDtypeStruct((B, N, D), x.dtype),
        grid_spec=pltpu.PrefetchScalarGridSpec(
            num_scalar_prefetch=0,
            grid=(B, nq),
            in_specs=[
                # query tile of x (leading batch dim squeezed)
                pl.BlockSpec((None, tq, D), lambda b, q: (b, q, 0)),
                # full-sequence x for K/V; block index constant over q -> DMA'd once per batch
                pl.BlockSpec((None, N, D), lambda b, q: (b, 0, 0)),
                pl.BlockSpec((D, inner), lambda b, q: (0, 0)),                 # Wq (scaled, wide)
                pl.BlockSpec((inner, D), lambda b, q: (0, 0)),                 # Wk (for K^T)
                pl.BlockSpec((D, inner), lambda b, q: (0, 0)),                 # Wv (wide)
                pl.BlockSpec((heads, dim_head, D), lambda b, q: (0, 0, 0)),    # Wout per-head slabs
                pl.BlockSpec((1, D), lambda b, q: (0, 0)),                     # bias
                pl.BlockSpec(memory_space=pltpu.MemorySpace.SMEM),             # talking_heads1
                pl.BlockSpec(memory_space=pltpu.MemorySpace.SMEM),             # talking_heads2
            ],
            out_specs=pl.BlockSpec((None, tq, D), lambda b, q: (b, q, 0)),
            scratch_shapes=[
                pltpu.VMEM((heads, dim_head, N), jnp.bfloat16),   # K^T cache (lane-dense in N)
                pltpu.VMEM((heads, N, D), jnp.bfloat16),          # V~ = w2-mixed (v @ Wout) cache
            ],
        ),
        compiler_params=pltpu.CompilerParams(
            # Batch axis feeds megacore; the query axis must stay "arbitrary" because the
            # K^T / V~ scratch caches persist across it.
            dimension_semantics=("parallel", "arbitrary"),
            vmem_limit_bytes=vmem_limit,
        ),
    )(x_bf, x_bf, wq_wide, wk_mat, wv_wide, wout_h, bout_2d, w1, w2)


def _reference(x, wqkv, wout, bout, w1, w2, heads, dim_head):
    """Pure-JAX f32 replica of the PyTorch forward (weights in PyTorch (out, in) layout)."""
    B, N, D = x.shape
    inner = heads * dim_head
    qkv = jnp.einsum('bnd,od->bno', x, wqkv)
    q, k, v = jnp.split(qkv, 3, axis=-1)
    to_heads = lambda t: t.reshape(B, N, heads, dim_head).transpose(0, 2, 1, 3)
    q, k, v = map(to_heads, (q, k, v))
    dots = jnp.einsum('bhid,bhjd->bhij', q, k) * (dim_head ** -0.5)
    dots = jnp.einsum('gh,bhij->bgij', w1, dots)          # talking_heads1 (1x1 conv)
    attn = jax.nn.softmax(dots, axis=-1)
    attn = jnp.einsum('gh,bhij->bgij', w2, attn)          # talking_heads2 (1x1 conv)
    out = jnp.einsum('bhij,bhjd->bhid', attn, v)
    out = out.transpose(0, 2, 1, 3).reshape(B, N, inner)
    return jnp.einsum('bni,oi->bno', out, wout) + bout


if __name__ == "__main__":
    B, N, dim = 2, 8, 32
    heads, dim_head = 4, 8
    inner = heads * dim_head

    key = jax.random.PRNGKey(0)
    ks = jax.random.split(key, 6)
    x = jax.random.normal(ks[0], (B, N, dim), jnp.float32)
    # Deterministic synthetic parameters (PyTorch layouts: Linear (out, in), Conv2d 1x1 squeezed).
    wqkv = jax.random.normal(ks[1], (3 * inner, dim), jnp.float32) * 0.1   # to_qkv.weight
    wout = jax.random.normal(ks[2], (dim, inner), jnp.float32) * 0.1       # to_out[0].weight
    bout = jax.random.normal(ks[3], (dim,), jnp.float32) * 0.1             # to_out[0].bias
    w1 = jax.random.normal(ks[4], (heads, heads), jnp.float32) * 0.3       # talking_heads1
    w2 = jax.random.normal(ks[5], (heads, heads), jnp.float32) * 0.3       # talking_heads2

    out = attention_forward(x, wqkv, wout, bout, w1, w2, heads=heads, dim_head=dim_head)
    out = jax.block_until_ready(out)

    ref = _reference(x, wqkv, wout, bout, w1, w2, heads, dim_head)
    assert out.shape == (B, N, dim)
    # Tolerance reflects bf16 MXU operands, the folded V~ rounding and the approx reciprocal.
    assert jnp.allclose(out, ref, atol=3e-2, rtol=3e-2), "Pallas output mismatch vs reference"
    print("KERNEL_OK")
</pallas_src>

<mosaic_0001>
module attributes {stable_mosaic.version = 11 : i64} {
  func.func @_attention_kernel(%arg0: i32, %arg1: i32, %arg2: memref<1x8x32xbf16, #tpu.memory_space<vmem>>, %arg3: memref<1x8x32xbf16, #tpu.memory_space<vmem>>, %arg4: memref<32x32xbf16, #tpu.memory_space<vmem>>, %arg5: memref<32x32xbf16, #tpu.memory_space<vmem>>, %arg6: memref<32x32xbf16, #tpu.memory_space<vmem>>, %arg7: memref<4x8x32xbf16, #tpu.memory_space<vmem>>, %arg8: memref<1x32xf32, #tpu.memory_space<vmem>>, %arg9: memref<4x4xf32, #tpu.memory_space<smem>>, %arg10: memref<4x4xf32, #tpu.memory_space<smem>>, %arg11: memref<1x8x32xf32, #tpu.memory_space<vmem>>, %arg12: memref<4x8x8xbf16, #tpu.memory_space<vmem>>, %arg13: memref<4x8x32xbf16, #tpu.memory_space<vmem>>) attributes {dimension_semantics = [#tpu.dimension_semantics<parallel>, #tpu.dimension_semantics<arbitrary>], iteration_bounds = array<i64: 2, 1>, scalar_prefetch = 0 : i64, scratch_operands = 2 : i64, tpu.core_type = #tpu.core_type<tc>, window_params = [{transform_indices = @transform_0, window_bounds = array<i64: 1, 8, 32>}, {transform_indices = @transform_1, window_bounds = array<i64: 1, 8, 32>}, {pipeline_mode = #tpu.pipeline_mode<synchronous>, transform_indices = @transform_2, window_bounds = array<i64: 32, 32>}, {pipeline_mode = #tpu.pipeline_mode<synchronous>, transform_indices = @transform_3, window_bounds = array<i64: 32, 32>}, {pipeline_mode = #tpu.pipeline_mode<synchronous>, transform_indices = @transform_4, window_bounds = array<i64: 32, 32>}, {pipeline_mode = #tpu.pipeline_mode<synchronous>, transform_indices = @transform_5, window_bounds = array<i64: 4, 8, 32>}, {pipeline_mode = #tpu.pipeline_mode<synchronous>, transform_indices = @transform_6, window_bounds = array<i64: 1, 32>}, {transform_indices = @transform_7, window_bounds = array<i64: 4, 4>}, {transform_indices = @transform_8, window_bounds = array<i64: 4, 4>}, {transform_indices = @transform_9, window_bounds = array<i64: 1, 8, 32>}]} {
    %c0_i32 = arith.constant 0 : i32
    %0 = arith.cmpi eq, %arg1, %c0_i32 : i32
    %1 = arith.extui %0 : i1 to i32
    %c0_i32_0 = arith.constant 0 : i32
    %2 = arith.cmpi ne, %1, %c0_i32_0 : i32
    scf.if %2 {
      %c0_80 = arith.constant 0 : index
      %c0_81 = arith.constant 0 : index
      %c0_82 = arith.constant 0 : index
      %154 = vector.load %arg3[%c0_80, %c0_81, %c0_82] : memref<1x8x32xbf16, #tpu.memory_space<vmem>>, vector<1x8x32xbf16>
      %155 = vector.shape_cast %154 : vector<1x8x32xbf16> to vector<8x32xbf16>
      %c0_83 = arith.constant 0 : index
      %c0_84 = arith.constant 0 : index
      %156 = vector.load %arg5[%c0_83, %c0_84] : memref<32x32xbf16, #tpu.memory_space<vmem>>, vector<32x32xbf16>
      "tpu.trace_start"() <{level = 10 : i32, message = "id,nd->in"}> : () -> ()
      %cst_85 = arith.constant dense<0.000000e+00> : vector<32x8xf32>
      %157 = tpu.matmul %156, %155, %cst_85 {dimension_numbers = #tpu.dot_dimension_numbers<[1], [1], [0], [0], [0, 0, 1, 0], [], []>} : vector<32x32xbf16>, vector<8x32xbf16>, vector<32x8xf32> -> vector<32x8xf32>
      "tpu.trace_stop"() : () -> ()
      %158 = vector.shape_cast %157 : vector<32x8xf32> to vector<4x8x8xf32>
      %159 = arith.truncf %158 : vector<4x8x8xf32> to vector<4x8x8xbf16>
      %c0_86 = arith.constant 0 : index
      %c0_87 = arith.constant 0 : index
      %c0_88 = arith.constant 0 : index
      %160 = vector.load %arg12[%c0_86, %c0_87, %c0_88] : memref<4x8x8xbf16, #tpu.memory_space<vmem>>, vector<4x8x8xbf16>
      tpu.vector_store %arg12[%c0_86, %c0_87, %c0_88], %159 {strides = array<i32>} : memref<4x8x8xbf16, #tpu.memory_space<vmem>>, vector<4x8x8xbf16>,
      %c0_89 = arith.constant 0 : index
      %c0_90 = arith.constant 0 : index
      %161 = vector.load %arg6[%c0_89, %c0_90] : memref<32x32xbf16, #tpu.memory_space<vmem>>, vector<32x32xbf16>
      %cst_91 = arith.constant dense<0.000000e+00> : vector<8x32xf32>
      %162 = tpu.matmul %155, %161, %cst_91 {dimension_numbers = #tpu.dot_dimension_numbers<[1], [0], [0], [1], [0, 0, 1, 1], [], []>} : vector<8x32xbf16>, vector<32x32xbf16>, vector<8x32xf32> -> vector<8x32xf32>
      %163 = vector.extract_strided_slice %162 {offsets = [0, 0], sizes = [8, 8], strides = [1, 1]} : vector<8x32xf32> to vector<8x8xf32>
      %164 = arith.truncf %163 : vector<8x8xf32> to vector<8x8xbf16>
      %c0_92 = arith.constant 0 : index
      %c0_93 = arith.constant 0 : index
      %c0_94 = arith.constant 0 : index
      %165 = vector.load %arg7[%c0_92, %c0_93, %c0_94] : memref<4x8x32xbf16, #tpu.memory_space<vmem>>, vector<1x8x32xbf16>
      %166 = vector.shape_cast %165 : vector<1x8x32xbf16> to vector<8x32xbf16>
      %cst_95 = arith.constant dense<0.000000e+00> : vector<8x32xf32>
      %167 = tpu.matmul %164, %166, %cst_95 {dimension_numbers = #tpu.dot_dimension_numbers<[1], [0], [0], [1], [0, 0, 1, 1], [], []>} : vector<8x8xbf16>, vector<8x32xbf16>, vector<8x32xf32> -> vector<8x32xf32>
      %168 = vector.extract_strided_slice %162 {offsets = [0, 8], sizes = [8, 8], strides = [1, 1]} : vector<8x32xf32> to vector<8x8xf32>
      %169 = arith.truncf %168 : vector<8x8xf32> to vector<8x8xbf16>
      %c1_96 = arith.constant 1 : index
      %c0_97 = arith.constant 0 : index
      %c0_98 = arith.constant 0 : index
      %170 = vector.load %arg7[%c1_96, %c0_97, %c0_98] : memref<4x8x32xbf16, #tpu.memory_space<vmem>>, vector<1x8x32xbf16>
      %171 = vector.shape_cast %170 : vector<1x8x32xbf16> to vector<8x32xbf16>
      %cst_99 = arith.constant dense<0.000000e+00> : vector<8x32xf32>
      %172 = tpu.matmul %169, %171, %cst_99 {dimension_numbers = #tpu.dot_dimension_numbers<[1], [0], [0], [1], [0, 0, 1, 1], [], []>} : vector<8x8xbf16>, vector<8x32xbf16>, vector<8x32xf32> -> vector<8x32xf32>
      %173 = vector.extract_strided_slice %162 {offsets = [0, 16], sizes = [8, 8], strides = [1, 1]} : vector<8x32xf32> to vector<8x8xf32>
      %174 = arith.truncf %173 : vector<8x8xf32> to vector<8x8xbf16>
      %c2_100 = arith.constant 2 : index
      %c0_101 = arith.constant 0 : index
      %c0_102 = arith.constant 0 : index
      %175 = vector.load %arg7[%c2_100, %c0_101, %c0_102] : memref<4x8x32xbf16, #tpu.memory_space<vmem>>, vector<1x8x32xbf16>
      %176 = vector.shape_cast %175 : vector<1x8x32xbf16> to vector<8x32xbf16>
      %cst_103 = arith.constant dense<0.000000e+00> : vector<8x32xf32>
      %177 = tpu.matmul %174, %176, %cst_103 {dimension_numbers = #tpu.dot_dimension_numbers<[1], [0], [0], [1], [0, 0, 1, 1], [], []>} : vector<8x8xbf16>, vector<8x32xbf16>, vector<8x32xf32> -> vector<8x32xf32>
      %178 = vector.extract_strided_slice %162 {offsets = [0, 24], sizes = [8, 8], strides = [1, 1]} : vector<8x32xf32> to vector<8x8xf32>
      %179 = arith.truncf %178 : vector<8x8xf32> to vector<8x8xbf16>
      %c3_104 = arith.constant 3 : index
      %c0_105 = arith.constant 0 : index
      %c0_106 = arith.constant 0 : index
      %180 = vector.load %arg7[%c3_104, %c0_105, %c0_106] : memref<4x8x32xbf16, #tpu.memory_space<vmem>>, vector<1x8x32xbf16>
      %181 = vector.shape_cast %180 : vector<1x8x32xbf16> to vector<8x32xbf16>
      %cst_107 = arith.constant dense<0.000000e+00> : vector<8x32xf32>
      %182 = tpu.matmul %179, %181, %cst_107 {dimension_numbers = #tpu.dot_dimension_numbers<[1], [0], [0], [1], [0, 0, 1, 1], [], []>} : vector<8x8xbf16>, vector<8x32xbf16>, vector<8x32xf32> -> vector<8x32xf32>
      %c0_108 = arith.constant 0 : index
      %c0_109 = arith.constant 0 : index
      %183 = memref.load %arg10[%c0_108, %c0_109] : memref<4x4xf32, #tpu.memory_space<smem>>
      %184 = vector.broadcast %183 : f32 to vector<8x32xf32>
      %185 = arith.mulf %184, %167 : vector<8x32xf32>
      %c1_110 = arith.constant 1 : index
      %c0_111 = arith.constant 0 : index
      %186 = memref.load %arg10[%c1_110, %c0_111] : memref<4x4xf32, #tpu.memory_space<smem>>
      %187 = vector.broadcast %186 : f32 to vector<8x32xf32>
      %188 = arith.mulf %187, %172 : vector<8x32xf32>
      %189 = arith.addf %185, %188 : vector<8x32xf32>
      %c2_112 = arith.constant 2 : index
      %c0_113 = arith.constant 0 : index
      %190 = memref.load %arg10[%c2_112, %c0_113] : memref<4x4xf32, #tpu.memory_space<smem>>
      %191 = vector.broadcast %190 : f32 to vector<8x32xf32>
      %192 = arith.mulf %191, %177 : vector<8x32xf32>
      %193 = arith.addf %189, %192 : vector<8x32xf32>
      %c3_114 = arith.constant 3 : index
      %c0_115 = arith.constant 0 : index
      %194 = memref.load %arg10[%c3_114, %c0_115] : memref<4x4xf32, #tpu.memory_space<smem>>
      %195 = vector.broadcast %194 : f32 to vector<8x32xf32>
      %196 = arith.mulf %195, %182 : vector<8x32xf32>
      %197 = arith.addf %193, %196 : vector<8x32xf32>
      %198 = arith.truncf %197 : vector<8x32xf32> to vector<8x32xbf16>
      %c0_116 = arith.constant 0 : index
      %c0_117 = arith.constant 0 : index
      %c0_118 = arith.constant 0 : index
      %199 = vector.load %arg13[%c0_116, %c0_117, %c0_118] : memref<4x8x32xbf16, #tpu.memory_space<vmem>>, vector<1x8x32xbf16>
      %200 = vector.shape_cast %199 : vector<1x8x32xbf16> to vector<8x32xbf16>
      %201 = vector.shape_cast %198 : vector<8x32xbf16> to vector<1x8x32xbf16>
      tpu.vector_store %arg13[%c0_116, %c0_117, %c0_118], %201 {strides = array<i32>} : memref<4x8x32xbf16, #tpu.memory_space<vmem>>, vector<1x8x32xbf16>,
      %c0_119 = arith.constant 0 : index
      %c1_120 = arith.constant 1 : index
      %202 = memref.load %arg10[%c0_119, %c1_120] : memref<4x4xf32, #tpu.memory_space<smem>>
      %203 = vector.broadcast %202 : f32 to vector<8x32xf32>
      %204 = arith.mulf %203, %167 : vector<8x32xf32>
      %c1_121 = arith.constant 1 : index
      %c1_122 = arith.constant 1 : index
      %205 = memref.load %arg10[%c1_121, %c1_122] : memref<4x4xf32, #tpu.memory_space<smem>>
      %206 = vector.broadcast %205 : f32 to vector<8x32xf32>
      %207 = arith.mulf %206, %172 : vector<8x32xf32>
      %208 = arith.addf %204, %207 : vector<8x32xf32>
      %c2_123 = arith.constant 2 : index
      %c1_124 = arith.constant 1 : index
      %209 = memref.load %arg10[%c2_123, %c1_124] : memref<4x4xf32, #tpu.memory_space<smem>>
      %210 = vector.broadcast %209 : f32 to vector<8x32xf32>
      %211 = arith.mulf %210, %177 : vector<8x32xf32>
      %212 = arith.addf %208, %211 : vector<8x32xf32>
      %c3_125 = arith.constant 3 : index
      %c1_126 = arith.constant 1 : index
      %213 = memref.load %arg10[%c3_125, %c1_126] : memref<4x4xf32, #tpu.memory_space<smem>>
      %214 = vector.broadcast %213 : f32 to vector<8x32xf32>
      %215 = arith.mulf %214, %182 : vector<8x32xf32>
      %216 = arith.addf %212, %215 : vector<8x32xf32>
      %217 = arith.truncf %216 : vector<8x32xf32> to vector<8x32xbf16>
      %c1_127 = arith.constant 1 : index
      %c0_128 = arith.constant 0 : index
      %c0_129 = arith.constant 0 : index
      %218 = vector.load %arg13[%c1_127, %c0_128, %c0_129] : memref<4x8x32xbf16, #tpu.memory_space<vmem>>, vector<1x8x32xbf16>
      %219 = vector.shape_cast %218 : vector<1x8x32xbf16> to vector<8x32xbf16>
      %220 = vector.shape_cast %217 : vector<8x32xbf16> to vector<1x8x32xbf16>
      tpu.vector_store %arg13[%c1_127, %c0_128, %c0_129], %220 {strides = array<i32>} : memref<4x8x32xbf16, #tpu.memory_space<vmem>>, vector<1x8x32xbf16>,
      %c0_130 = arith.constant 0 : index
      %c2_131 = arith.constant 2 : index
      %221 = memref.load %arg10[%c0_130, %c2_131] : memref<4x4xf32, #tpu.memory_space<smem>>
      %222 = vector.broadcast %221 : f32 to vector<8x32xf32>
      %223 = arith.mulf %222, %167 : vector<8x32xf32>
      %c1_132 = arith.constant 1 : index
      %c2_133 = arith.constant 2 : index
      %224 = memref.load %arg10[%c1_132, %c2_133] : memref<4x4xf32, #tpu.memory_space<smem>>
      %225 = vector.broadcast %224 : f32 to vector<8x32xf32>
      %226 = arith.mulf %225, %172 : vector<8x32xf32>
      %227 = arith.addf %223, %226 : vector<8x32xf32>
      %c2_134 = arith.constant 2 : index
      %c2_135 = arith.constant 2 : index
      %228 = memref.load %arg10[%c2_134, %c2_135] : memref<4x4xf32, #tpu.memory_space<smem>>
      %229 = vector.broadcast %228 : f32 to vector<8x32xf32>
      %230 = arith.mulf %229, %177 : vector<8x32xf32>
      %231 = arith.addf %227, %230 : vector<8x32xf32>
      %c3_136 = arith.constant 3 : index
      %c2_137 = arith.constant 2 : index
      %232 = memref.load %arg10[%c3_136, %c2_137] : memref<4x4xf32, #tpu.memory_space<smem>>
      %233 = vector.broadcast %232 : f32 to vector<8x32xf32>
      %234 = arith.mulf %233, %182 : vector<8x32xf32>
      %235 = arith.addf %231, %234 : vector<8x32xf32>
      %236 = arith.truncf %235 : vector<8x32xf32> to vector<8x32xbf16>
      %c2_138 = arith.constant 2 : index
      %c0_139 = arith.constant 0 : index
      %c0_140 = arith.constant 0 : index
      %237 = vector.load %arg13[%c2_138, %c0_139, %c0_140] : memref<4x8x32xbf16, #tpu.memory_space<vmem>>, vector<1x8x32xbf16>
      %238 = vector.shape_cast %237 : vector<1x8x32xbf16> to vector<8x32xbf16>
      %239 = vector.shape_cast %236 : vector<8x32xbf16> to vector<1x8x32xbf16>
      tpu.vector_store %arg13[%c2_138, %c0_139, %c0_140], %239 {strides = array<i32>} : memref<4x8x32xbf16, #tpu.memory_space<vmem>>, vector<1x8x32xbf16>,
      %c0_141 = arith.constant 0 : index
      %c3_142 = arith.constant 3 : index
      %240 = memref.load %arg10[%c0_141, %c3_142] : memref<4x4xf32, #tpu.memory_space<smem>>
      %241 = vector.broadcast %240 : f32 to vector<8x32xf32>
      %242 = arith.mulf %241, %167 : vector<8x32xf32>
      %c1_143 = arith.constant 1 : index
      %c3_144 = arith.constant 3 : index
      %243 = memref.load %arg10[%c1_143, %c3_144] : memref<4x4xf32, #tpu.memory_space<smem>>
      %244 = vector.broadcast %243 : f32 to vector<8x32xf32>
      %245 = arith.mulf %244, %172 : vector<8x32xf32>
      %246 = arith.addf %242, %245 : vector<8x32xf32>
      %c2_145 = arith.constant 2 : index
      %c3_146 = arith.constant 3 : index
      %247 = memref.load %arg10[%c2_145, %c3_146] : memref<4x4xf32, #tpu.memory_space<smem>>
      %248 = vector.broadcast %247 : f32 to vector<8x32xf32>
      %249 = arith.mulf %248, %177 : vector<8x32xf32>
      %250 = arith.addf %246, %249 : vector<8x32xf32>
      %c3_147 = arith.constant 3 : index
      %c3_148 = arith.constant 3 : index
      %251 = memref.load %arg10[%c3_147, %c3_148] : memref<4x4xf32, #tpu.memory_space<smem>>
      %252 = vector.broadcast %251 : f32 to vector<8x32xf32>
      %253 = arith.mulf %252, %182 : vector<8x32xf32>
      %254 = arith.addf %250, %253 : vector<8x32xf32>
      %255 = arith.truncf %254 : vector<8x32xf32> to vector<8x32xbf16>
      %c3_149 = arith.constant 3 : index
      %c0_150 = arith.constant 0 : index
      %c0_151 = arith.constant 0 : index
      %256 = vector.load %arg13[%c3_149, %c0_150, %c0_151] : memref<4x8x32xbf16, #tpu.memory_space<vmem>>, vector<1x8x32xbf16>
      %257 = vector.shape_cast %256 : vector<1x8x32xbf16> to vector<8x32xbf16>
      %258 = vector.shape_cast %255 : vector<8x32xbf16> to vector<1x8x32xbf16>
      tpu.vector_store %arg13[%c3_149, %c0_150, %c0_151], %258 {strides = array<i32>} : memref<4x8x32xbf16, #tpu.memory_space<vmem>>, vector<1x8x32xbf16>,
    } else {
    }
    %c0 = arith.constant 0 : index
    %c0_1 = arith.constant 0 : index
    %c0_2 = arith.constant 0 : index
    %3 = vector.load %arg2[%c0, %c0_1, %c0_2] : memref<1x8x32xbf16, #tpu.memory_space<vmem>>, vector<1x8x32xbf16>
    %4 = vector.shape_cast %3 : vector<1x8x32xbf16> to vector<8x32xbf16>
    %c0_3 = arith.constant 0 : index
    %c0_4 = arith.constant 0 : index
    %5 = vector.load %arg4[%c0_3, %c0_4] : memref<32x32xbf16, #tpu.memory_space<vmem>>, vector<32x32xbf16>
    %cst = arith.constant dense<0.000000e+00> : vector<8x32xf32>
    %6 = tpu.matmul %4, %5, %cst {dimension_numbers = #tpu.dot_dimension_numbers<[1], [0], [0], [1], [0, 0, 1, 1], [], []>} : vector<8x32xbf16>, vector<32x32xbf16>, vector<8x32xf32> -> vector<8x32xf32>
    %7 = vector.extract_strided_slice %6 {offsets = [0, 0], sizes = [8, 8], strides = [1, 1]} : vector<8x32xf32> to vector<8x8xf32>
    %8 = arith.truncf %7 : vector<8x8xf32> to vector<8x8xbf16>
    %c0_5 = arith.constant 0 : index
    %c0_6 = arith.constant 0 : index
    %c0_7 = arith.constant 0 : index
    %9 = vector.load %arg12[%c0_5, %c0_6, %c0_7] : memref<4x8x8xbf16, #tpu.memory_space<vmem>>, vector<1x8x8xbf16>
    %10 = vector.shape_cast %9 : vector<1x8x8xbf16> to vector<8x8xbf16>
    %cst_8 = arith.constant dense<0.000000e+00> : vector<8x8xf32>
    %11 = tpu.matmul %8, %10, %cst_8 {dimension_numbers = #tpu.dot_dimension_numbers<[1], [0], [0], [1], [0, 0, 1, 1], [], []>} : vector<8x8xbf16>, vector<8x8xbf16>, vector<8x8xf32> -> vector<8x8xf32>
    %12 = vector.extract_strided_slice %6 {offsets = [0, 8], sizes = [8, 8], strides = [1, 1]} : vector<8x32xf32> to vector<8x8xf32>
    %13 = arith.truncf %12 : vector<8x8xf32> to vector<8x8xbf16>
    %c1 = arith.constant 1 : index
    %c0_9 = arith.constant 0 : index
    %c0_10 = arith.constant 0 : index
    %14 = vector.load %arg12[%c1, %c0_9, %c0_10] : memref<4x8x8xbf16, #tpu.memory_space<vmem>>, vector<1x8x8xbf16>
    %15 = vector.shape_cast %14 : vector<1x8x8xbf16> to vector<8x8xbf16>
    %cst_11 = arith.constant dense<0.000000e+00> : vector<8x8xf32>
    %16 = tpu.matmul %13, %15, %cst_11 {dimension_numbers = #tpu.dot_dimension_numbers<[1], [0], [0], [1], [0, 0, 1, 1], [], []>} : vector<8x8xbf16>, vector<8x8xbf16>, vector<8x8xf32> -> vector<8x8xf32>
    %17 = vector.extract_strided_slice %6 {offsets = [0, 16], sizes = [8, 8], strides = [1, 1]} : vector<8x32xf32> to vector<8x8xf32>
    %18 = arith.truncf %17 : vector<8x8xf32> to vector<8x8xbf16>
    %c2 = arith.constant 2 : index
    %c0_12 = arith.constant 0 : index
    %c0_13 = arith.constant 0 : index
    %19 = vector.load %arg12[%c2, %c0_12, %c0_13] : memref<4x8x8xbf16, #tpu.memory_space<vmem>>, vector<1x8x8xbf16>
    %20 = vector.shape_cast %19 : vector<1x8x8xbf16> to vector<8x8xbf16>
    %cst_14 = arith.constant dense<0.000000e+00> : vector<8x8xf32>
    %21 = tpu.matmul %18, %20, %cst_14 {dimension_numbers = #tpu.dot_dimension_numbers<[1], [0], [0], [1], [0, 0, 1, 1], [], []>} : vector<8x8xbf16>, vector<8x8xbf16>, vector<8x8xf32> -> vector<8x8xf32>
    %22 = vector.extract_strided_slice %6 {offsets = [0, 24], sizes = [8, 8], strides = [1, 1]} : vector<8x32xf32> to vector<8x8xf32>
    %23 = arith.truncf %22 : vector<8x8xf32> to vector<8x8xbf16>
    %c3 = arith.constant 3 : index
    %c0_15 = arith.constant 0 : index
    %c0_16 = arith.constant 0 : index
    %24 = vector.load %arg12[%c3, %c0_15, %c0_16] : memref<4x8x8xbf16, #tpu.memory_space<vmem>>, vector<1x8x8xbf16>
    %25 = vector.shape_cast %24 : vector<1x8x8xbf16> to vector<8x8xbf16>
    %cst_17 = arith.constant dense<0.000000e+00> : vector<8x8xf32>
    %26 = tpu.matmul %23, %25, %cst_17 {dimension_numbers = #tpu.dot_dimension_numbers<[1], [0], [0], [1], [0, 0, 1, 1], [], []>} : vector<8x8xbf16>, vector<8x8xbf16>, vector<8x8xf32> -> vector<8x8xf32>
    %cst_18 = arith.constant 0.000000e+00 : f32
    %27 = vector.broadcast %cst_18 : f32 to vector<8x32xf32>
    %c0_19 = arith.constant 0 : index
    %c0_20 = arith.constant 0 : index
    %28 = memref.load %arg9[%c0_19, %c0_20] : memref<4x4xf32, #tpu.memory_space<smem>>
    %29 = vector.broadcast %28 : f32 to vector<8x8xf32>
    %30 = arith.mulf %29, %11 : vector<8x8xf32>
    %c0_21 = arith.constant 0 : index
    %c1_22 = arith.constant 1 : index
    %31 = memref.load %arg9[%c0_21, %c1_22] : memref<4x4xf32, #tpu.memory_space<smem>>
    %32 = vector.broadcast %31 : f32 to vector<8x8xf32>
    %33 = arith.mulf %32, %16 : vector<8x8xf32>
    %34 = arith.addf %30, %33 : vector<8x8xf32>
    %c0_23 = arith.constant 0 : index
    %c2_24 = arith.constant 2 : index
    %35 = memref.load %arg9[%c0_23, %c2_24] : memref<4x4xf32, #tpu.memory_space<smem>>
    %36 = vector.broadcast %35 : f32 to vector<8x8xf32>
    %37 = arith.mulf %36, %21 : vector<8x8xf32>
    %38 = arith.addf %34, %37 : vector<8x8xf32>
    %c0_25 = arith.constant 0 : index
    %c3_26 = arith.constant 3 : index
    %39 = memref.load %arg9[%c0_25, %c3_26] : memref<4x4xf32, #tpu.memory_space<smem>>
    %40 = vector.broadcast %39 : f32 to vector<8x8xf32>
    %41 = arith.mulf %40, %26 : vector<8x8xf32>
    %42 = arith.addf %38, %41 : vector<8x8xf32>
    %cst_27 = arith.constant dense<0xFF800000> : vector<8xf32>
    %43 = vector.multi_reduction <maximumf>, %42, %cst_27 [1] : vector<8x8xf32> to vector<8xf32>
    %44 = vector.shape_cast %43 : vector<8xf32> to vector<8x1xf32>
    %45 = vector.broadcast %44 : vector<8x1xf32> to vector<8x8xf32>
    %46 = arith.subf %42, %45 : vector<8x8xf32>
    %47 = math.exp %46 : vector<8x8xf32>
    %cst_28 = arith.constant dense<0.000000e+00> : vector<8xf32>
    %48 = vector.multi_reduction <add>, %47, %cst_28 [1] : vector<8x8xf32> to vector<8xf32>
    %49 = vector.shape_cast %48 : vector<8xf32> to vector<8x1xf32>
    %50 = tpu.reciprocal %49 {approx = true} : vector<8x1xf32> -> vector<8x1xf32>
    %51 = vector.broadcast %50 : vector<8x1xf32> to vector<8x8xf32>
    %52 = arith.mulf %47, %51 : vector<8x8xf32>
    %53 = arith.truncf %52 : vector<8x8xf32> to vector<8x8xbf16>
    %c0_29 = arith.constant 0 : index
    %c0_30 = arith.constant 0 : index
    %c0_31 = arith.constant 0 : index
    %54 = vector.load %arg13[%c0_29, %c0_30, %c0_31] : memref<4x8x32xbf16, #tpu.memory_space<vmem>>, vector<1x8x32xbf16>
    %55 = vector.shape_cast %54 : vector<1x8x32xbf16> to vector<8x32xbf16>
    %cst_32 = arith.constant dense<0.000000e+00> : vector<8x32xf32>
    %56 = tpu.matmul %53, %55, %cst_32 {dimension_numbers = #tpu.dot_dimension_numbers<[1], [0], [0], [1], [0, 0, 1, 1], [], []>} : vector<8x8xbf16>, vector<8x32xbf16>, vector<8x32xf32> -> vector<8x32xf32>
    %57 = arith.addf %27, %56 : vector<8x32xf32>
    %c1_33 = arith.constant 1 : index
    %c0_34 = arith.constant 0 : index
    %58 = memref.load %arg9[%c1_33, %c0_34] : memref<4x4xf32, #tpu.memory_space<smem>>
    %59 = vector.broadcast %58 : f32 to vector<8x8xf32>
    %60 = arith.mulf %59, %11 : vector<8x8xf32>
    %c1_35 = arith.constant 1 : index
    %c1_36 = arith.constant 1 : index
    %61 = memref.load %arg9[%c1_35, %c1_36] : memref<4x4xf32, #tpu.memory_space<smem>>
    %62 = vector.broadcast %61 : f32 to vector<8x8xf32>
    %63 = arith.mulf %62, %16 : vector<8x8xf32>
    %64 = arith.addf %60, %63 : vector<8x8xf32>
    %c1_37 = arith.constant 1 : index
    %c2_38 = arith.constant 2 : index
    %65 = memref.load %arg9[%c1_37, %c2_38] : memref<4x4xf32, #tpu.memory_space<smem>>
    %66 = vector.broadcast %65 : f32 to vector<8x8xf32>
    %67 = arith.mulf %66, %21 : vector<8x8xf32>
    %68 = arith.addf %64, %67 : vector<8x8xf32>
    %c1_39 = arith.constant 1 : index
    %c3_40 = arith.constant 3 : index
    %69 = memref.load %arg9[%c1_39, %c3_40] : memref<4x4xf32, #tpu.memory_space<smem>>
    %70 = vector.broadcast %69 : f32 to vector<8x8xf32>
    %71 = arith.mulf %70, %26 : vector<8x8xf32>
    %72 = arith.addf %68, %71 : vector<8x8xf32>
    %cst_41 = arith.constant dense<0xFF800000> : vector<8xf32>
    %73 = vector.multi_reduction <maximumf>, %72, %cst_41 [1] : vector<8x8xf32> to vector<8xf32>
    %74 = vector.shape_cast %73 : vector<8xf32> to vector<8x1xf32>
    %75 = vector.broadcast %74 : vector<8x1xf32> to vector<8x8xf32>
    %76 = arith.subf %72, %75 : vector<8x8xf32>
    %77 = math.exp %76 : vector<8x8xf32>
    %cst_42 = arith.constant dense<0.000000e+00> : vector<8xf32>
    %78 = vector.multi_reduction <add>, %77, %cst_42 [1] : vector<8x8xf32> to vector<8xf32>
    %79 = vector.shape_cast %78 : vector<8xf32> to vector<8x1xf32>
    %80 = tpu.reciprocal %79 {approx = true} : vector<8x1xf32> -> vector<8x1xf32>
    %81 = vector.broadcast %80 : vector<8x1xf32> to vector<8x8xf32>
    %82 = arith.mulf %77, %81 : vector<8x8xf32>
    %83 = arith.truncf %82 : vector<8x8xf32> to vector<8x8xbf16>
    %c1_43 = arith.constant 1 : index
    %c0_44 = arith.constant 0 : index
    %c0_45 = arith.constant 0 : index
    %84 = vector.load %arg13[%c1_43, %c0_44, %c0_45] : memref<4x8x32xbf16, #tpu.memory_space<vmem>>, vector<1x8x32xbf16>
    %85 = vector.shape_cast %84 : vector<1x8x32xbf16> to vector<8x32xbf16>
    %cst_46 = arith.constant dense<0.000000e+00> : vector<8x32xf32>
    %86 = tpu.matmul %83, %85, %cst_46 {dimension_numbers = #tpu.dot_dimension_numbers<[1], [0], [0], [1], [0, 0, 1, 1], [], []>} : vector<8x8xbf16>, vector<8x32xbf16>, vector<8x32xf32> -> vector<8x32xf32>
    %87 = arith.addf %57, %86 : vector<8x32xf32>
    %c2_47 = arith.constant 2 : index
    %c0_48 = arith.constant 0 : index
    %88 = memref.load %arg9[%c2_47, %c0_48] : memref<4x4xf32, #tpu.memory_space<smem>>
    %89 = vector.broadcast %88 : f32 to vector<8x8xf32>
    %90 = arith.mulf %89, %11 : vector<8x8xf32>
    %c2_49 = arith.constant 2 : index
    %c1_50 = arith.constant 1 : index
    %91 = memref.load %arg9[%c2_49, %c1_50] : memref<4x4xf32, #tpu.memory_space<smem>>
    %92 = vector.broadcast %91 : f32 to vector<8x8xf32>
    %93 = arith.mulf %92, %16 : vector<8x8xf32>
    %94 = arith.addf %90, %93 : vector<8x8xf32>
    %c2_51 = arith.constant 2 : index
    %c2_52 = arith.constant 2 : index
    %95 = memref.load %arg9[%c2_51, %c2_52] : memref<4x4xf32, #tpu.memory_space<smem>>
    %96 = vector.broadcast %95 : f32 to vector<8x8xf32>
    %97 = arith.mulf %96, %21 : vector<8x8xf32>
    %98 = arith.addf %94, %97 : vector<8x8xf32>
    %c2_53 = arith.constant 2 : index
    %c3_54 = arith.constant 3 : index
    %99 = memref.load %arg9[%c2_53, %c3_54] : memref<4x4xf32, #tpu.memory_space<smem>>
    %100 = vector.broadcast %99 : f32 to vector<8x8xf32>
    %101 = arith.mulf %100, %26 : vector<8x8xf32>
    %102 = arith.addf %98, %101 : vector<8x8xf32>
    %cst_55 = arith.constant dense<0xFF800000> : vector<8xf32>
    %103 = vector.multi_reduction <maximumf>, %102, %cst_55 [1] : vector<8x8xf32> to vector<8xf32>
    %104 = vector.shape_cast %103 : vector<8xf32> to vector<8x1xf32>
    %105 = vector.broadcast %104 : vector<8x1xf32> to vector<8x8xf32>
    %106 = arith.subf %102, %105 : vector<8x8xf32>
    %107 = math.exp %106 : vector<8x8xf32>
    %cst_56 = arith.constant dense<0.000000e+00> : vector<8xf32>
    %108 = vector.multi_reduction <add>, %107, %cst_56 [1] : vector<8x8xf32> to vector<8xf32>
    %109 = vector.shape_cast %108 : vector<8xf32> to vector<8x1xf32>
    %110 = tpu.reciprocal %109 {approx = true} : vector<8x1xf32> -> vector<8x1xf32>
    %111 = vector.broadcast %110 : vector<8x1xf32> to vector<8x8xf32>
    %112 = arith.mulf %107, %111 : vector<8x8xf32>
    %113 = arith.truncf %112 : vector<8x8xf32> to vector<8x8xbf16>
    %c2_57 = arith.constant 2 : index
    %c0_58 = arith.constant 0 : index
    %c0_59 = arith.constant 0 : index
    %114 = vector.load %arg13[%c2_57, %c0_58, %c0_59] : memref<4x8x32xbf16, #tpu.memory_space<vmem>>, vector<1x8x32xbf16>
    %115 = vector.shape_cast %114 : vector<1x8x32xbf16> to vector<8x32xbf16>
    %cst_60 = arith.constant dense<0.000000e+00> : vector<8x32xf32>
    %116 = tpu.matmul %113, %115, %cst_60 {dimension_numbers = #tpu.dot_dimension_numbers<[1], [0], [0], [1], [0, 0, 1, 1], [], []>} : vector<8x8xbf16>, vector<8x32xbf16>, vector<8x32xf32> -> vector<8x32xf32>
    %117 = arith.addf %87, %116 : vector<8x32xf32>
    %c3_61 = arith.constant 3 : index
    %c0_62 = arith.constant 0 : index
    %118 = memref.load %arg9[%c3_61, %c0_62] : memref<4x4xf32, #tpu.memory_space<smem>>
    %119 = vector.broadcast %118 : f32 to vector<8x8xf32>
    %120 = arith.mulf %119, %11 : vector<8x8xf32>
    %c3_63 = arith.constant 3 : index
    %c1_64 = arith.constant 1 : index
    %121 = memref.load %arg9[%c3_63, %c1_64] : memref<4x4xf32, #tpu.memory_space<smem>>
    %122 = vector.broadcast %121 : f32 to vector<8x8xf32>
    %123 = arith.mulf %122, %16 : vector<8x8xf32>
    %124 = arith.addf %120, %123 : vector<8x8xf32>
    %c3_65 = arith.constant 3 : index
    %c2_66 = arith.constant 2 : index
    %125 = memref.load %arg9[%c3_65, %c2_66] : memref<4x4xf32, #tpu.memory_space<smem>>
    %126 = vector.broadcast %125 : f32 to vector<8x8xf32>
    %127 = arith.mulf %126, %21 : vector<8x8xf32>
    %128 = arith.addf %124, %127 : vector<8x8xf32>
    %c3_67 = arith.constant 3 : index
    %c3_68 = arith.constant 3 : index
    %129 = memref.load %arg9[%c3_67, %c3_68] : memref<4x4xf32, #tpu.memory_space<smem>>
    %130 = vector.broadcast %129 : f32 to vector<8x8xf32>
    %131 = arith.mulf %130, %26 : vector<8x8xf32>
    %132 = arith.addf %128, %131 : vector<8x8xf32>
    %cst_69 = arith.constant dense<0xFF800000> : vector<8xf32>
    %133 = vector.multi_reduction <maximumf>, %132, %cst_69 [1] : vector<8x8xf32> to vector<8xf32>
    %134 = vector.shape_cast %133 : vector<8xf32> to vector<8x1xf32>
    %135 = vector.broadcast %134 : vector<8x1xf32> to vector<8x8xf32>
    %136 = arith.subf %132, %135 : vector<8x8xf32>
    %137 = math.exp %136 : vector<8x8xf32>
    %cst_70 = arith.constant dense<0.000000e+00> : vector<8xf32>
    %138 = vector.multi_reduction <add>, %137, %cst_70 [1] : vector<8x8xf32> to vector<8xf32>
    %139 = vector.shape_cast %138 : vector<8xf32> to vector<8x1xf32>
    %140 = tpu.reciprocal %139 {approx = true} : vector<8x1xf32> -> vector<8x1xf32>
    %141 = vector.broadcast %140 : vector<8x1xf32> to vector<8x8xf32>
    %142 = arith.mulf %137, %141 : vector<8x8xf32>
    %143 = arith.truncf %142 : vector<8x8xf32> to vector<8x8xbf16>
    %c3_71 = arith.constant 3 : index
    %c0_72 = arith.constant 0 : index
    %c0_73 = arith.constant 0 : index
    %144 = vector.load %arg13[%c3_71, %c0_72, %c0_73] : memref<4x8x32xbf16, #tpu.memory_space<vmem>>, vector<1x8x32xbf16>
    %145 = vector.shape_cast %144 : vector<1x8x32xbf16> to vector<8x32xbf16>
    %cst_74 = arith.constant dense<0.000000e+00> : vector<8x32xf32>
    %146 = tpu.matmul %143, %145, %cst_74 {dimension_numbers = #tpu.dot_dimension_numbers<[1], [0], [0], [1], [0, 0, 1, 1], [], []>} : vector<8x8xbf16>, vector<8x32xbf16>, vector<8x32xf32> -> vector<8x32xf32>
    %147 = arith.addf %117, %146 : vector<8x32xf32>
    %c0_75 = arith.constant 0 : index
    %c0_76 = arith.constant 0 : index
    %148 = vector.load %arg8[%c0_75, %c0_76] : memref<1x32xf32, #tpu.memory_space<vmem>>, vector<1x32xf32>
    %149 = vector.broadcast %148 : vector<1x32xf32> to vector<8x32xf32>
    %150 = arith.addf %147, %149 : vector<8x32xf32>
    %c0_77 = arith.constant 0 : index
    %c0_78 = arith.constant 0 : index
    %c0_79 = arith.constant 0 : index
    %151 = vector.load %arg11[%c0_77, %c0_78, %c0_79] : memref<1x8x32xf32, #tpu.memory_space<vmem>>, vector<1x8x32xf32>
    %152 = vector.shape_cast %151 : vector<1x8x32xf32> to vector<8x32xf32>
    %153 = vector.shape_cast %150 : vector<8x32xf32> to vector<1x8x32xf32>
    tpu.vector_store %arg11[%c0_77, %c0_78, %c0_79], %153 {strides = array<i32>} : memref<1x8x32xf32, #tpu.memory_space<vmem>>, vector<1x8x32xf32>,
    return
  }
  func.func @transform_0(%arg0: i32, %arg1: i32) -> (i32, i32, i32) {
    %c0_i32 = arith.constant 0 : i32
    %c0_i32_0 = arith.constant 0 : i32
    return %arg0, %arg1, %c0_i32 : i32, i32, i32
  }
  func.func @transform_1(%arg0: i32, %arg1: i32) -> (i32, i32, i32) {
    %c0_i32 = arith.constant 0 : i32
    %c0_i32_0 = arith.constant 0 : i32
    %c0_i32_1 = arith.constant 0 : i32
    return %arg0, %c0_i32, %c0_i32_0 : i32, i32, i32
  }
  func.func @transform_2(%arg0: i32, %arg1: i32) -> (i32, i32) {
    %c0_i32 = arith.constant 0 : i32
    %c0_i32_0 = arith.constant 0 : i32
    %c0_i32_1 = arith.constant 0 : i32
    return %c0_i32, %c0_i32_0 : i32, i32
  }
  func.func @transform_3(%arg0: i32, %arg1: i32) -> (i32, i32) {
    %c0_i32 = arith.constant 0 : i32
    %c0_i32_0 = arith.constant 0 : i32
    %c0_i32_1 = arith.constant 0 : i32
    return %c0_i32, %c0_i32_0 : i32, i32
  }
  func.func @transform_4(%arg0: i32, %arg1: i32) -> (i32, i32) {
    %c0_i32 = arith.constant 0 : i32
    %c0_i32_0 = arith.constant 0 : i32
    %c0_i32_1 = arith.constant 0 : i32
    return %c0_i32, %c0_i32_0 : i32, i32
  }
  func.func @transform_5(%arg0: i32, %arg1: i32) -> (i32, i32, i32) {
    %c0_i32 = arith.constant 0 : i32
    %c0_i32_0 = arith.constant 0 : i32
    %c0_i32_1 = arith.constant 0 : i32
    %c0_i32_2 = arith.constant 0 : i32
    return %c0_i32, %c0_i32_0, %c0_i32_1 : i32, i32, i32
  }
  func.func @transform_6(%arg0: i32, %arg1: i32) -> (i32, i32) {
    %c0_i32 = arith.constant 0 : i32
    %c0_i32_0 = arith.constant 0 : i32
    %c0_i32_1 = arith.constant 0 : i32
    return %c0_i32, %c0_i32_0 : i32, i32
  }
  func.func @transform_7(%arg0: i32, %arg1: i32) -> (i32, i32) {
    %c0_i32 = arith.constant 0 : i32
    %c0_i32_0 = arith.constant 0 : i32
    %c0_i32_1 = arith.constant 0 : i32
    return %c0_i32, %c0_i32_0 : i32, i32
  }
  func.func @transform_8(%arg0: i32, %arg1: i32) -> (i32, i32) {
    %c0_i32 = arith.constant 0 : i32
    %c0_i32_0 = arith.constant 0 : i32
    %c0_i32_1 = arith.constant 0 : i32
    return %c0_i32, %c0_i32_0 : i32, i32
  }
  func.func @transform_9(%arg0: i32, %arg1: i32) -> (i32, i32, i32) {
    %c0_i32 = arith.constant 0 : i32
    %c0_i32_0 = arith.constant 0 : i32
    return %arg0, %arg1, %c0_i32 : i32, i32, i32
  }
}

</mosaic_0001>

<llo_original>
// kernel: tpu_custom_call.1
$region0: #{tpu_custom_call.1}
  #allocation0 [shape = 'u32[]', space=smem, size = 0x4, offset = 0x4, fixed_abs, tag = 'smem constant byte address 0x4 - core index']
  #allocation1 [shape = 'u32[144,128]{1,0:T(1,128)}', space=vmem, size = 0x12000, scoped, tag = 'internal scratch']
  #allocation2 [shape = 'bf16[4,8,8]{2,1,0:T(8,128)(2,1)}', space=vmem, size = 0x2000, scoped, tag = 'scratch operand']
  #allocation3 [shape = 'bf16[4,8,32]{2,1,0:T(8,128)(2,1)}', space=vmem, size = 0x2000, scoped, tag = 'scratch operand']
  %s0 = inlined_call_operand.hbm [shape: bf16[2,8,32], index: 0, kind: input, shape index: {}]
  %s1 = inlined_call_operand.hbm [shape: bf16[2,8,32], index: 1, kind: input, shape index: {}]
  %s2 = inlined_call_operand.hbm [shape: bf16[32,32], index: 2, kind: input, shape index: {}]
  %s3 = inlined_call_operand.hbm [shape: bf16[32,32], index: 3, kind: input, shape index: {}]
  %s4 = inlined_call_operand.hbm [shape: bf16[32,32], index: 4, kind: input, shape index: {}]
  %s5 = inlined_call_operand.vmem [shape: bf16[4,8,32], index: 5, kind: input, shape index: {}]
  %s6 = inlined_call_operand.vmem [shape: f32[1,32], index: 6, kind: input, shape index: {}]
  %s7 = inlined_call_operand.vmem [shape: f32[4,4], index: 7, kind: input, shape index: {}]
  %s8 = inlined_call_operand.vmem [shape: f32[4,4], index: 8, kind: input, shape index: {}]
  %s9 = inlined_call_operand.hbm [shape: f32[2,8,32], index: 9, kind: output, shape index: {}]
  %s10 = sld [smem:[#allocation0]]
  $region101: #{tpu_custom_call.1} parent=0
    _
  %s12 = ssub.s32 1, %s10
  %s13 = scalar_select 0, %s12, %s10
  $region1: #{tpu_custom_call.1} parent=0
    #allocation4 [shape = 'u8[4096]{0}', space=vmem, size = 0x1000, scoped, tag = 'input window, operand 0']
    #allocation5 [shape = 's32[2]{0}', space=sflag, size = 0x8, scoped, tag = 'scoped memory for tpu_custom_call.1']
    #allocation6 [shape = 's32[2]{0}', space=sflag, size = 0x8, scoped, tag = 'scoped memory for tpu_custom_call.1']
    #allocation7 [shape = 's32[2]{0}', space=sflag, size = 0x8, scoped, tag = 'scoped memory for tpu_custom_call.1']
    #allocation8 [shape = 'u8[4096]{0}', space=vmem, size = 0x1000, scoped, tag = 'input window, operand 1']
    #allocation9 [shape = 's32[2]{0}', space=sflag, size = 0x8, scoped, tag = 'scoped memory for tpu_custom_call.1']
    #allocation10 [shape = 'u8[8192]{0}', space=vmem, size = 0x2000, scoped, tag = 'input window, operand 2, single buffered']
    #allocation11 [shape = 'u8[8192]{0}', space=vmem, size = 0x2000, scoped, tag = 'input window, operand 3, single buffered']
    #allocation12 [shape = 's32[1]{0}', space=sflag, size = 0x4, scoped, tag = 'scoped memory for tpu_custom_call.1']
    #allocation13 [shape = 'u8[8192]{0}', space=vmem, size = 0x2000, scoped, tag = 'input window, operand 4, single buffered']
    #allocation14 [shape = 'u8[2048]{0}', space=smem, size = 0x800, scoped, tag = 'input window, operand 7, single buffered']
    #allocation15 [shape = 'u8[2048]{0}', space=smem, size = 0x800, scoped, tag = 'input window, operand 8, single buffered']
    #allocation16 [shape = 's32[1]{0}', space=sflag, size = 0x4, scoped, tag = 'scoped memory for tpu_custom_call.1']
    #allocation17 [shape = 'u8[8192]{0}', space=vmem, size = 0x2000, scoped, tag = 'output window, operand 0']
    %14 = vsyncpa [#allocation5], 0
    %s15 = scalar_lea.sflag [#allocation5], 1
    %16 = vsyncpa %s15, 0
    %17 = vsyncpa [#allocation9], 0
    %s18 = scalar_lea.sflag [#allocation9], 1
    %19 = vsyncpa %s18, 0
    %20 = vsyncpa [#allocation12], 0
    %21 = vsyncpa [#allocation7], 0
    %22 = vsyncpa [#allocation16], 0
    %23 = vsyncpa [#allocation6], 0
    %s24 = scalar_lea.sflag [#allocation6], 1
    %25 = vsyncpa %s24, 0
    loop: start=0, step=1, limit=4
    $region2: #{tpu_custom_call.1} parent=1 // loop_pre_header
      _
    $region3: #{tpu_custom_call.1} parent=1 // loop_header
      %s27 = sphi 0, %s31
      %p28 = scmp.ge.s32.totalorder %s27, 4
      %s34 = sphi 0, %s46
      %s35 = sphi 0, %s42
      %s36 = sphi 0, %s34
      %s37 = sphi 0, %s35
      %s38 = sphi 0, %s36
      %s39 = sphi 0, %s37
      %s51 = sphi 0, %s53
      %s54 = sphi 0, %s51
      %s55 = sphi 0, %s54
      %s71 = sphi 0, %s55
      %s77 = sphi 0, %s79
      %s80 = sphi 0, %s77
      %s81 = sphi 0, %s80
      %s97 = sphi 0, %s81
      %s101 = sphi 0, %s101
      %s103 = sphi 0, %s101
      %s104 = sphi 0, %s103
      %s118 = sphi 0, %s104
      %s122 = sphi 0, %s122
      %s124 = sphi 0, %s122
      %s125 = sphi 0, %s124
      %s139 = sphi 0, %s125
      %s143 = sphi 0, %s143
      %s145 = sphi 0, %s143
      %s146 = sphi 0, %s145
      %s160 = sphi 0, %s146
      %s164 = sphi 0, %s164
      %s166 = sphi 0, %s164
      %s167 = sphi 0, %s166
      %s181 = sphi 0, %s167
      %s185 = sphi 0, %s185
      %s187 = sphi 0, %s185
      %s188 = sphi 0, %s187
      %s202 = sphi 0, %s188
      %s206 = sphi 0, %s206
      %s208 = sphi 0, %s206
      %s209 = sphi 0, %s208
      %s223 = sphi 0, %s209
      %s227 = sphi 0, %s227
      %s229 = sphi 0, %s227
      %s230 = sphi 0, %s229
      %s244 = sphi 0, %s230
      %s252 = sphi 0, %s254
      %s255 = sphi 0, %s252
      %s256 = sphi 0, %s255
      %s272 = sphi 0, %s256
    $region4: #{tpu_custom_call.1} parent=1 // loop_header_branch
      %30 = sbr.rel (%p28) target = $region8
    $region5: #{tpu_custom_call.1} parent=1 // loop_body
      %s32 = ssub.s32 %s27, 1
      %s33 = ssub.s32 %s27, 2
      %s40 = sadd.s32 1, %s35
      %p41 = scmp.ge.s32.totalorder %s40, 1
      %s42 = scalar_select %p41, 0, %s40
      %s43 = sadd.s32 1, %s34
      %s44 = scalar_select %p41, %s43, %s34
      %p45 = scmp.ge.s32.totalorder %s44, 2
      %s46 = scalar_select %p45, 0, %s44
      %s47 = ssub.s32 %s34, %s46
      %s48 = ssub.s32 %s35, %s42
      %s49 = sor.u32 %s47, %s48
      %p50 = scmp.eq.s32.totalorder %s49, 0
      %s52 = sadd.s32 %s51, 1
      %s53 = scalar_select %p50, %s51, %s52
      %p56 = pneg %p50
      %p57 = scmp.eq.s32.totalorder %s27, 1
      %p58 = por %p56, %p57
      %p59 = scmp.ne.s32.totalorder %s51, %s54
      %p60 = scmp.eq.s32.totalorder %s27, 0
      %p61 = por %p59, %p60
      %p62 = scmp.ne.s32.totalorder %s51, %s54
      %p63 = scmp.eq.s32.totalorder %s32, 1
      %p64 = por %p62, %p63
      %p65 = scmp.ne.s32.totalorder %s54, %s55
      %p66 = scmp.eq.s32.totalorder %s32, 0
      %p67 = por %p65, %p66
      %p68 = scmp.ne.s32.totalorder %s54, %s55
      %p69 = scmp.eq.s32.totalorder %s33, 1
      %p70 = por %p68, %p69
      %p72 = scmp.ne.s32.totalorder %s55, %s71
      %p73 = scmp.eq.s32.totalorder %s33, 0
      %p74 = por %p72, %p73
      %s75 = ssub.s32 %s34, %s46
      %p76 = scmp.eq.s32.totalorder %s75, 0
      %s78 = sadd.s32 %s77, 1
      %s79 = scalar_select %p76, %s77, %s78
      %p82 = pneg %p76
      %p83 = scmp.eq.s32.totalorder %s27, 1
      %p84 = por %p82, %p83
      %p85 = scmp.ne.s32.totalorder %s77, %s80
      %p86 = scmp.eq.s32.totalorder %s27, 0
      %p87 = por %p85, %p86
      %p88 = scmp.ne.s32.totalorder %s77, %s80
      %p89 = scmp.eq.s32.totalorder %s32, 1
      %p90 = por %p88, %p89
      %p91 = scmp.ne.s32.totalorder %s80, %s81
      %p92 = scmp.eq.s32.totalorder %s32, 0
      %p93 = por %p91, %p92
      %p94 = scmp.ne.s32.totalorder %s80, %s81
      %p95 = scmp.eq.s32.totalorder %s33, 1
      %p96 = por %p94, %p95
      %p98 = scmp.ne.s32.totalorder %s81, %s97
      %p99 = scmp.eq.s32.totalorder %s33, 0
      %p100 = por %p98, %p99
      %s102 = sadd.s32 %s101, 1
      %p105 = scmp.eq.s32.totalorder %s27, 1
      %p106 = scmp.ne.s32.totalorder %s101, %s103
      %p107 = scmp.eq.s32.totalorder %s27, 0
      %p108 = por %p106, %p107
      %p109 = scmp.ne.s32.totalorder %s101, %s103
      %p110 = scmp.eq.s32.totalorder %s32, 1
      %p111 = por %p109, %p110
      %p112 = scmp.ne.s32.totalorder %s103, %s104
      %p113 = scmp.eq.s32.totalorder %s32, 0
      %p114 = por %p112, %p113
      %p115 = scmp.ne.s32.totalorder %s103, %s104
      %p116 = scmp.eq.s32.totalorder %s33, 1
      %p117 = por %p115, %p116
      %p119 = scmp.ne.s32.totalorder %s104, %s118
      %p120 = scmp.eq.s32.totalorder %s33, 0
      %p121 = por %p119, %p120
      %s123 = sadd.s32 %s122, 1
      %p126 = scmp.eq.s32.totalorder %s27, 1
      %p127 = scmp.ne.s32.totalorder %s122, %s124
      %p128 = scmp.eq.s32.totalorder %s27, 0
      %p129 = por %p127, %p128
      %p130 = scmp.ne.s32.totalorder %s122, %s124
      %p131 = scmp.eq.s32.totalorder %s32, 1
      %p132 = por %p130, %p131
      %p133 = scmp.ne.s32.totalorder %s124, %s125
      %p134 = scmp.eq.s32.totalorder %s32, 0
      %p135 = por %p133, %p134
      %p136 = scmp.ne.s32.totalorder %s124, %s125
      %p137 = scmp.eq.s32.totalorder %s33, 1
      %p138 = por %p136, %p137
      %p140 = scmp.ne.s32.totalorder %s125, %s139
      %p141 = scmp.eq.s32.totalorder %s33, 0
      %p142 = por %p140, %p141
      %s144 = sadd.s32 %s143, 1
      %p147 = scmp.eq.s32.totalorder %s27, 1
      %p148 = scmp.ne.s32.totalorder %s143, %s145
      %p149 = scmp.eq.s32.totalorder %s27, 0
      %p150 = por %p148, %p149
      %p151 = scmp.ne.s32.totalorder %s143, %s145
      %p152 = scmp.eq.s32.totalorder %s32, 1
      %p153 = por %p151, %p152
      %p154 = scmp.ne.s32.totalorder %s145, %s146
      %p155 = scmp.eq.s32.totalorder %s32, 0
      %p156 = por %p154, %p155
      %p157 = scmp.ne.s32.totalorder %s145, %s146
      %p158 = scmp.eq.s32.totalorder %s33, 1
      %p159 = por %p157, %p158
      %p161 = scmp.ne.s32.totalorder %s146, %s160
      %p162 = scmp.eq.s32.totalorder %s33, 0
      %p163 = por %p161, %p162
      %s165 = sadd.s32 %s164, 1
      %p168 = scmp.eq.s32.totalorder %s27, 1
      %p169 = scmp.ne.s32.totalorder %s164, %s166
      %p170 = scmp.eq.s32.totalorder %s27, 0
      %p171 = por %p169, %p170
      %p172 = scmp.ne.s32.totalorder %s164, %s166
      %p173 = scmp.eq.s32.totalorder %s32, 1
      %p174 = por %p172, %p173
      %p175 = scmp.ne.s32.totalorder %s166, %s167
      %p176 = scmp.eq.s32.totalorder %s32, 0
      %p177 = por %p175, %p176
      %p178 = scmp.ne.s32.totalorder %s166, %s167
      %p179 = scmp.eq.s32.totalorder %s33, 1
      %p180 = por %p178, %p179
      %p182 = scmp.ne.s32.totalorder %s167, %s181
      %p183 = scmp.eq.s32.totalorder %s33, 0
      %p184 = por %p182, %p183
      %s186 = sadd.s32 %s185, 1
      %p189 = scmp.eq.s32.totalorder %s27, 1
      %p190 = scmp.ne.s32.totalorder %s185, %s187
      %p191 = scmp.eq.s32.totalorder %s27, 0
      %p192 = por %p190, %p191
      %p193 = scmp.ne.s32.totalorder %s185, %s187
      %p194 = scmp.eq.s32.totalorder %s32, 1
      %p195 = por %p193, %p194
      %p196 = scmp.ne.s32.totalorder %s187, %s188
      %p197 = scmp.eq.s32.totalorder %s32, 0
      %p198 = por %p196, %p197
      %p199 = scmp.ne.s32.totalorder %s187, %s188
      %p200 = scmp.eq.s32.totalorder %s33, 1
      %p201 = por %p199, %p200
      %p203 = scmp.ne.s32.totalorder %s188, %s202
      %p204 = scmp.eq.s32.totalorder %s33, 0
      %p205 = por %p203, %p204
      %s207 = sadd.s32 %s206, 1
      %p210 = scmp.eq.s32.totalorder %s27, 1
      %p211 = scmp.ne.s32.totalorder %s206, %s208
      %p212 = scmp.eq.s32.totalorder %s27, 0
      %p213 = por %p211, %p212
      %p214 = scmp.ne.s32.totalorder %s206, %s208
      %p215 = scmp.eq.s32.totalorder %s32, 1
      %p216 = por %p214, %p215
      %p217 = scmp.ne.s32.totalorder %s208, %s209
      %p218 = scmp.eq.s32.totalorder %s32, 0
      %p219 = por %p217, %p218
      %p220 = scmp.ne.s32.totalorder %s208, %s209
      %p221 = scmp.eq.s32.totalorder %s33, 1
      %p222 = por %p220, %p221
      %p224 = scmp.ne.s32.totalorder %s209, %s223
      %p225 = scmp.eq.s32.totalorder %s33, 0
      %p226 = por %p224, %p225
      %s228 = sadd.s32 %s227, 1
      %p231 = scmp.eq.s32.totalorder %s27, 1
      %p232 = scmp.ne.s32.totalorder %s227, %s229
      %p233 = scmp.eq.s32.totalorder %s27, 0
      %p234 = por %p232, %p233
      %p235 = scmp.ne.s32.totalorder %s227, %s229
      %p236 = scmp.eq.s32.totalorder %s32, 1
      %p237 = por %p235, %p236
      %p238 = scmp.ne.s32.totalorder %s229, %s230
      %p239 = scmp.eq.s32.totalorder %s32, 0
      %p240 = por %p238, %p239
      %p241 = scmp.ne.s32.totalorder %s229, %s230
      %p242 = scmp.eq.s32.totalorder %s33, 1
      %p243 = por %p241, %p242
      %p245 = scmp.ne.s32.totalorder %s230, %s244
      %p246 = scmp.eq.s32.totalorder %s33, 0
      %p247 = por %p245, %p246
      %s248 = ssub.s32 %s34, %s46
      %s249 = ssub.s32 %s35, %s42
      %s250 = sor.u32 %s248, %s249
      %p251 = scmp.eq.s32.totalorder %s250, 0
      %s253 = sadd.s32 %s252, 1
      %s254 = scalar_select %p251, %s252, %s253
      %p257 = pneg %p251
      %p258 = scmp.eq.s32.totalorder %s27, 1
      %p259 = por %p257, %p258
      %p260 = scmp.ne.s32.totalorder %s252, %s255
      %p261 = scmp.eq.s32.totalorder %s27, 0
      %p262 = por %p260, %p261
      %p263 = scmp.ne.s32.totalorder %s252, %s255
      %p264 = scmp.eq.s32.totalorder %s32, 1
      %p265 = por %p263, %p264
      %p266 = scmp.ne.s32.totalorder %s255, %s256
      %p267 = scmp.eq.s32.totalorder %s32, 0
      %p268 = por %p266, %p267
      %p269 = scmp.ne.s32.totalorder %s255, %s256
      %p270 = scmp.eq.s32.totalorder %s33, 1
      %p271 = por %p269, %p270
      %p273 = scmp.ne.s32.totalorder %s256, %s272
      %p274 = scmp.eq.s32.totalorder %s33, 0
      %p275 = por %p273, %p274
      %p276 = scmp.le.s32.totalorder 1, %s27
      %p277 = scmp.lt.s32.totalorder %s27, 3
      %p278 = pnand %p276, %p277
      %p279 = pneg %p278
      // Predicated region
      $region9: #{tpu_custom_call.1} parent=5 // pred_check
        _
      $region10: #{tpu_custom_call.1} parent=5 // pred_check_branch
        %281 = sbr.rel (%p278) target = $region12
      $region11: #{tpu_custom_call.1} parent=5 // pred_region
        %s282 = ssub.s32 %s27, 1
        // Predicated region
        $region13: #{tpu_custom_call.1} parent=11 // pred_check
          %p283 = pneg %p114
        $region14: #{tpu_custom_call.1} parent=11 // pred_check_branch
          %285 = sbr.rel (%p283) target = $region16
        $region15: #{tpu_custom_call.1} parent=11 // pred_region
          %s287 = ssub.s32 256, 256
          %288 = vsyncadd [#allocation9], %s287
          %s289 = sshll.u32 [#allocation10], 4
          %s290 = int_to_ptr.vmem [resolvable:$true] %s289
          %295 = dma.hbm_to_vmem [thread:$0]  %s2, 256, %s290, [#allocation9], 64, 64, 4
        $region16: #{tpu_custom_call.1} parent=11 // pred_fallthru
          _
        // Predicated region
        $region17: #{tpu_custom_call.1} parent=11 // pred_check
          %p296 = pneg %p135
        $region18: #{tpu_custom_call.1} parent=11 // pred_check_branch
          %298 = sbr.rel (%p296) target = $region20
        $region19: #{tpu_custom_call.1} parent=11 // pred_region
          %s300 = ssub.s32 256, 256
          %301 = vsyncadd [#allocation12], %s300
          %s302 = sshll.u32 [#allocation11], 4
          %s303 = int_to_ptr.vmem [resolvable:$true] %s302
          %308 = dma.hbm_to_vmem [thread:$0]  %s3, 256, %s303, [#allocation12], 64, 64, 4
        $region20: #{tpu_custom_call.1} parent=11 // pred_fallthru
          _
        // Predicated region
        $region21: #{tpu_custom_call.1} parent=11 // pred_check
          %p309 = pneg %p156
        $region22: #{tpu_custom_call.1} parent=11 // pred_check_branch
          %311 = sbr.rel (%p309) target = $region24
        $region23: #{tpu_custom_call.1} parent=11 // pred_region
          %s313 = ssub.s32 256, 256
          %314 = vsyncadd [#allocation12], %s313
          %s315 = sshll.u32 [#allocation13], 4
          %s316 = int_to_ptr.vmem [resolvable:$true] %s315
          %321 = dma.hbm_to_vmem [thread:$0]  %s4, 256, %s316, [#allocation12], 64, 64, 4
        $region24: #{tpu_custom_call.1} parent=11 // pred_fallthru
          _
        // Predicated region
        $region25: #{tpu_custom_call.1} parent=11 // pred_check
          %p322 = pneg %p177
        $region26: #{tpu_custom_call.1} parent=11 // pred_check_branch
          %324 = sbr.rel (%p322) target = $region28
        $region27: #{tpu_custom_call.1} parent=11 // pred_region
          _
        $region28: #{tpu_custom_call.1} parent=11 // pred_fallthru
          _
        // Predicated region
        $region29: #{tpu_custom_call.1} parent=11 // pred_check
          %p325 = pneg %p198
        $region30: #{tpu_custom_call.1} parent=11 // pred_check_branch
          %327 = sbr.rel (%p325) target = $region32
        $region31: #{tpu_custom_call.1} parent=11 // pred_region
          _
        $region32: #{tpu_custom_call.1} parent=11 // pred_fallthru
          _
        // Predicated region
        $region33: #{tpu_custom_call.1} parent=11 // pred_check
          %p328 = pneg %p219
        $region34: #{tpu_custom_call.1} parent=11 // pred_check_branch
          %330 = sbr.rel (%p328) target = $region36
        $region35: #{tpu_custom_call.1} parent=11 // pred_region
          %s332 = ssub.s32 64, 64
          %333 = vsyncadd [#allocation7], %s332
          %s335 = sshll.u32 %s7, 4
          %s336 = int_to_ptr.vmem [resolvable:$true] %s335
          %338 = dma.vmem_to_smem %s336, 64, [#allocation14], [#allocation7]
        $region36: #{tpu_custom_call.1} parent=11 // pred_fallthru
          _
        // Predicated region
        $region37: #{tpu_custom_call.1} parent=11 // pred_check
          %p339 = pneg %p240
        $region38: #{tpu_custom_call.1} parent=11 // pred_check_branch
          %341 = sbr.rel (%p339) target = $region40
        $region39: #{tpu_custom_call.1} parent=11 // pred_region
          %s343 = ssub.s32 64, 64
          %344 = vsyncadd [#allocation16], %s343
          %s346 = sshll.u32 %s8, 4
          %s347 = int_to_ptr.vmem [resolvable:$true] %s346
          %349 = dma.vmem_to_smem %s347, 64, [#allocation15], [#allocation16]
        $region40: #{tpu_custom_call.1} parent=11 // pred_fallthru
          _
      $region12: #{tpu_custom_call.1} parent=5 // pred_fallthru
        _
      %p350 = scmp.lt.s32.totalorder %s27, 2
      // Predicated region
      $region41: #{tpu_custom_call.1} parent=5 // pred_check
        %p351 = pneg %p350
      $region42: #{tpu_custom_call.1} parent=5 // pred_check_branch
        %353 = sbr.rel (%p351) target = $region44
      $region43: #{tpu_custom_call.1} parent=5 // pred_region
        // Predicated region
        $region45: #{tpu_custom_call.1} parent=43 // pred_check
          %p354 = pneg %p61
        $region46: #{tpu_custom_call.1} parent=43 // pred_check_branch
          %356 = sbr.rel (%p354) target = $region48
        $region47: #{tpu_custom_call.1} parent=43 // pred_region
          %s357 = sand.u32 %s51, 1
          %s358 = scalar_lea.sflag [#allocation5], %s357
          %s359 = sand.u32 %s51, 1
          %s360 = smul.addr %s359, 4
          %s361 = scalar_lea.vmem [#allocation4], %s360
          %s363 = ssub.s32 64, 64
          %364 = vsyncadd %s358, %s363
          %s365 = sadd.s32 %s35, %s34
          %s366 = smul.addr %s365, 64
          %s367 = scalar_lea.hbm %s0, %s366
          %s369 = sshll.u32 %s361, 4
          %s370 = int_to_ptr.vmem [resolvable:$true] %s369
          %372 = dma.hbm_to_vmem [thread:$0]  %s367, 64, %s370, %s358
        $region48: #{tpu_custom_call.1} parent=43 // pred_fallthru
          _
        // Predicated region
        $region49: #{tpu_custom_call.1} parent=43 // pred_check
          %p373 = pneg %p87
        $region50: #{tpu_custom_call.1} parent=43 // pred_check_branch
          %375 = sbr.rel (%p373) target = $region52
        $region51: #{tpu_custom_call.1} parent=43 // pred_region
          %s376 = sand.u32 %s27, 1
          %s377 = scalar_lea.sflag [#allocation9], %s376
          %s378 = sand.u32 %s77, 1
          %s379 = smul.addr %s378, 4
          %s380 = scalar_lea.vmem [#allocation8], %s379
          %s382 = ssub.s32 64, 64
          %383 = vsyncadd %s377, %s382
          %s384 = smul.addr %s34, 64
          %s385 = scalar_lea.hbm %s1, %s384
          %s387 = sshll.u32 %s380, 4
          %s388 = int_to_ptr.vmem [resolvable:$true] %s387
          %390 = dma.hbm_to_vmem [thread:$0]  %s385, 64, %s388, %s377
        $region52: #{tpu_custom_call.1} parent=43 // pred_fallthru
          _
      $region44: #{tpu_custom_call.1} parent=5 // pred_fallthru
        _
      %p391 = scmp.le.s32.totalorder 1, %s27
      %p392 = scmp.lt.s32.totalorder %s27, 3
      %p393 = pnand %p391, %p392
      %p394 = pneg %p393
      // Predicated region
      $region53: #{tpu_custom_call.1} parent=5 // pred_check
        _
      $region54: #{tpu_custom_call.1} parent=5 // pred_check_branch
        %396 = sbr.rel (%p393) target = $region56
      $region55: #{tpu_custom_call.1} parent=5 // pred_region
        %s397 = ssub.s32 %s27, 1
        %s398 = sand.u32 %s54, 1
        %s399 = scalar_lea.sflag [#allocation5], %s398
        %s400 = sand.u32 %s54, 1
        %s401 = smul.addr %s400, 4
        %s402 = scalar_lea.vmem [#allocation4], %s401
        // Predicated region
        $region57: #{tpu_custom_call.1} parent=55 // pred_check
          %p403 = pneg %p67
        $region58: #{tpu_custom_call.1} parent=55 // pred_check_branch
          %405 = sbr.rel (%p403) target = $region60
        $region59: #{tpu_custom_call.1} parent=55 // pred_region
          %406 = dma.done %s399, 64
        $region60: #{tpu_custom_call.1} parent=55 // pred_fallthru
          _
        %s407 = sand.u32 %s32, 1
        %s408 = scalar_lea.sflag [#allocation9], %s407
        %s409 = sand.u32 %s80, 1
        %s410 = smul.addr %s409, 4
        %s411 = scalar_lea.vmem [#allocation8], %s410
        // Predicated region
        $region61: #{tpu_custom_call.1} parent=55 // pred_check
          %p412 = pneg %p93
        $region62: #{tpu_custom_call.1} parent=55 // pred_check_branch
          %414 = sbr.rel (%p412) target = $region64
        $region63: #{tpu_custom_call.1} parent=55 // pred_region
          %415 = dma.done %s408, 64
        $region64: #{tpu_custom_call.1} parent=55 // pred_fallthru
          _
        // Predicated region
        $region65: #{tpu_custom_call.1} parent=55 // pred_check
          %p416 = pneg %p114
        $region66: #{tpu_custom_call.1} parent=55 // pred_check_branch
          %418 = sbr.rel (%p416) target = $region68
        $region67: #{tpu_custom_call.1} parent=55 // pred_region
          %419 = dma.done [#allocation9], 256
        $region68: #{tpu_custom_call.1} parent=55 // pred_fallthru
          _
        // Predicated region
        $region69: #{tpu_custom_call.1} parent=55 // pred_check
          %p420 = pneg %p135
        $region70: #{tpu_custom_call.1} parent=55 // pred_check_branch
          %422 = sbr.rel (%p420) target = $region72
        $region71: #{tpu_custom_call.1} parent=55 // pred_region
          %423 = dma.done [#allocation12], 256
        $region72: #{tpu_custom_call.1} parent=55 // pred_fallthru
          _
        // Predicated region
        $region73: #{tpu_custom_call.1} parent=55 // pred_check
          %p424 = pneg %p156
        $region74: #{tpu_custom_call.1} parent=55 // pred_check_branch
          %426 = sbr.rel (%p424) target = $region76
        $region75: #{tpu_custom_call.1} parent=55 // pred_region
          %427 = dma.done [#allocation12], 256
        $region76: #{tpu_custom_call.1} parent=55 // pred_fallthru
          _
        // Predicated region
        $region77: #{tpu_custom_call.1} parent=55 // pred_check
          %p428 = pneg %p219
        $region78: #{tpu_custom_call.1} parent=55 // pred_check_branch
          %430 = sbr.rel (%p428) target = $region80
        $region79: #{tpu_custom_call.1} parent=55 // pred_region
          %431 = dma.done [#allocation7], 64
        $region80: #{tpu_custom_call.1} parent=55 // pred_fallthru
          _
        // Predicated region
        $region81: #{tpu_custom_call.1} parent=55 // pred_check
          %p432 = pneg %p240
        $region82: #{tpu_custom_call.1} parent=55 // pred_check_branch
          %434 = sbr.rel (%p432) target = $region84
        $region83: #{tpu_custom_call.1} parent=55 // pred_region
          %435 = dma.done [#allocation16], 64
        $region84: #{tpu_custom_call.1} parent=55 // pred_fallthru
          _
        %436 = sfence
        %s437 = sand.u32 %s54, 1
        %s438 = scalar_lea.sflag [#allocation5], %s437
        %s439 = sand.u32 %s54, 1
        %s440 = smul.addr %s439, 4
        %s441 = scalar_lea.vmem [#allocation4], %s440
        %p442 = pneg %p67
        %p443 = pneg %p64
        %s444 = sand.u32 %s32, 1
        %s445 = scalar_lea.sflag [#allocation9], %s444
        %s446 = sand.u32 %s80, 1
        %s447 = smul.addr %s446, 4
        %s448 = scalar_lea.vmem [#allocation8], %s447
        %p449 = pneg %p93
        %p450 = pneg %p90
        %p451 = pneg %p114
        %p452 = pneg %p111
        %p453 = pneg %p135
        %p454 = pneg %p132
        %p455 = pneg %p156
        %p456 = pneg %p153
        %p457 = pneg %p177
        %p458 = pneg %p174
        %p459 = pneg %p198
        %p460 = pneg %p195
        %p461 = pneg %p219
        %p462 = pneg %p216
        %p463 = pneg %p240
        %p464 = pneg %p237
        %p465 = pneg %p268
        %p466 = pneg %p265
        %s467 = sand.u32 %s255, 1
        %s468 = scalar_lea.sflag [#allocation6], %s467
        %s469 = sand.u32 %s255, 1
        %s470 = smul.addr %s469, 8
        %s471 = scalar_lea.vmem [#allocation17], %s470
        %p473 = scmp.eq.s32.totalorder %s37, 0
        // Predicated region
        $region85: #{tpu_custom_call.1} parent=55 // pred_check
          %p474 = pneg %p473
        $region86: #{tpu_custom_call.1} parent=55 // pred_check_branch
          %476 = sbr.rel (%p474) target = $region88
        $region87: #{tpu_custom_call.1} parent=55 // pred_region
          %v477 = vld [vmem:[%s411] sm:$0xf]
          %v478 = vld [vmem:[#allocation11] sm:$0xf]
          %v479 = vld [vmem:[#allocation11 + $0x4] sm:$0xf]
          %v480 = vld [vmem:[#allocation11 + $0x8] sm:$0xf]
          %v481 = vld [vmem:[#allocation11 + $0xc] sm:$0xf]
          %v486 = vunpack.c.l.b16 %v478
          %v487 = vunpack.c.l.b16 %v479
          %v488 = vunpack.c.l.b16 %v480
          %v489 = vunpack.c.l.b16 %v481
          %v490 = vpack.c.b16 %v487, %v486
          %v491 = vpack.c.b16 %v489, %v488
          %vm492 = vcmask 261120
          %v494 = vsel %vm492, %v490, 0
          %v497 = vsel %vm492, %v491, 0
          %v500 = vsel %vm492, %v477, 0
          %502 = vmatprep.subr.bf16.mxu0 0
          %503 = vmatpush1.bf16.xpose.msra.mxu0 %v500
          %504 = vmatprep.subr.bf16.mxu0 0
          %505 = vmatpush1.bf16.xpose.msra.mxu0 0
          %506 = vmatprep.subr.bf16.mxu0 0
          %507 = vmatpush1.bf16.xpose.msra.mxu0 0
          %508 = vmatprep.subr.bf16.mxu0 0
          %509 = vmatpush1.bf16.xpose.msra.mxu0 0
          %510 = vmatprep.subr.bf16.mxu0 0
          %511 = vmatpush1.bf16.xpose.msra.mxu0 0
          %512 = vmatprep.subr.bf16.mxu0 0
          %513 = vmatpush1.bf16.xpose.msra.mxu0 0
          %514 = vmatprep.subr.bf16.mxu0 0
          %515 = vmatpush1.bf16.xpose.msra.mxu0 0
          %516 = vmatprep.subr.bf16.mxu0 0
          %517 = vmatpush1.bf16.xpose.msra.mxu0 0
          %518 = vmatprep.subr.bf16.mxu0 0
          %519 = vmatpush1.bf16.xpose.msra.mxu0 0
          %520 = vmatprep.subr.bf16.mxu0 0
          %521 = vmatpush1.bf16.xpose.msra.mxu0 0
          %522 = vmatprep.subr.bf16.mxu0 0
          %523 = vmatpush1.bf16.xpose.msra.mxu0 0
          %524 = vmatprep.subr.bf16.mxu0 0
          %525 = vmatpush1.bf16.xpose.msra.mxu0 0
          %526 = vmatprep.subr.bf16.mxu0 0
          %527 = vmatpush1.bf16.xpose.msra.mxu0 0
          %528 = vmatprep.subr.bf16.mxu0 0
          %529 = vmatpush1.bf16.xpose.msra.mxu0 0
          %530 = vmatprep.subr.bf16.mxu0 0
          %531 = vmatpush1.bf16.xpose.msra.mxu0 0
          %532 = vmatprep.subr.bf16.mxu0 0
          %533 = vmatpush1.bf16.xpose.msra.mxu0 0
          %534 = vmatprep.mubr.bf16.mxu0 0
          %535 = vmatmul.mubr.bf16.gmra.mrb[0].mxu0 %v494
          %v536 = vpop.f32.mrb[0].mxu0
          %v537 = vadd.f32 0.0, %v536
          %v538 = vpop.f32.mrb[0].mxu0
          %v539 = vpop.f32.mrb[0].mxu0
          %v540 = vadd.f32 0.0, %v539
          %v541 = vpop.f32.mrb[0].mxu0
          %542 = vmatprep.mubr.bf16.mxu0 0
          %543 = vmatmul.mubr.bf16.gmra.mrb[0].mxu0 %v497
          %v544 = vpop.f32.mrb[0].mxu0
          %v545 = vadd.f32 0.0, %v544
          %v546 = vpop.f32.mrb[0].mxu0
          %v547 = vpop.f32.mrb[0].mxu0
          %v548 = vadd.f32 0.0, %v547
          %v549 = vpop.f32.mrb[0].mxu0
          %550 = vdwg.mxu0
          %v551 = vpack.c.bf16 %v537, %v537
          %v552 = vpack.c.bf16 %v540, %v540
          %v553 = vpack.c.bf16 %v545, %v545
          %v554 = vpack.c.bf16 %v548, %v548
          %vm555 = vcmask 60416
          %556 = vst.msk [vmem:[#allocation2] sm:$0xf] %vm555, %v551
          %557 = vst.msk [vmem:[#allocation2 + $0x4] sm:$0xf] %vm555, %v552
          %558 = vst.msk [vmem:[#allocation2 + $0x8] sm:$0xf] %vm555, %v553
          %559 = vst.msk [vmem:[#allocation2 + $0xc] sm:$0xf] %vm555, %v554
          %v560 = vld [vmem:[#allocation13] sm:$0xf]
          %v561 = vld [vmem:[#allocation13 + $0x4] sm:$0xf]
          %v562 = vld [vmem:[#allocation13 + $0x8] sm:$0xf]
          %v563 = vld [vmem:[#allocation13 + $0xc] sm:$0xf]
          %v568 = vunpack.c.l.b16 %v560
          %v569 = vunpack.c.l.b16 %v561
          %v570 = vunpack.c.l.b16 %v562
          %v571 = vunpack.c.l.b16 %v563
          %v572 = vpack.c.b16 %v569, %v568
          %v573 = vpack.c.b16 %v571, %v570
          %576 = vmatprep.subr.bf16.mxu0 0
          %577 = vmatpush1.bf16.msra.mxu0 %v572
          %578 = vmatprep.subr.bf16.mxu0 0
          %579 = vmatpush1.bf16.msra.mxu0 %v573
          %580 = vmatprep.subr.bf16.mxu0 0
          %581 = vmatpush1.bf16.msra.mxu0 0
          %582 = vmatprep.subr.bf16.mxu0 0
          %583 = vmatpush1.bf16.msra.mxu0 0
          %584 = vmatprep.subr.bf16.mxu0 0
          %585 = vmatpush1.bf16.msra.mxu0 0
          %586 = vmatprep.subr.bf16.mxu0 0
          %587 = vmatpush1.bf16.msra.mxu0 0
          %588 = vmatprep.subr.bf16.mxu0 0
          %589 = vmatpush1.bf16.msra.mxu0 0
          %590 = vmatprep.subr.bf16.mxu0 0
          %591 = vmatpush1.bf16.msra.mxu0 0
          %592 = vmatprep.subr.bf16.mxu0 0
          %593 = vmatpush1.bf16.msra.mxu0 0
          %594 = vmatprep.subr.bf16.mxu0 0
          %595 = vmatpush1.bf16.msra.mxu0 0
          %596 = vmatprep.subr.bf16.mxu0 0
          %597 = vmatpush1.bf16.msra.mxu0 0
          %598 = vmatprep.subr.bf16.mxu0 0
          %599 = vmatpush1.bf16.msra.mxu0 0
          %600 = vmatprep.subr.bf16.mxu0 0
          %601 = vmatpush1.bf16.msra.mxu0 0
          %602 = vmatprep.subr.bf16.mxu0 0
          %603 = vmatpush1.bf16.msra.mxu0 0
          %604 = vmatprep.subr.bf16.mxu0 0
          %605 = vmatpush1.bf16.msra.mxu0 0
          %606 = vmatprep.subr.bf16.mxu0 0
          %607 = vmatpush1.bf16.msra.mxu0 0
          %608 = vmatprep.mubr.bf16.mxu0 0
          %609 = vmatmul.mubr.bf16.gmra.mrb[0].mxu0 %v500
          %v610 = vpop.f32.mrb[0].mxu0
          %v611 = vadd.f32 0.0, %v610
          %v612 = vpop.f32.mrb[0].mxu0
          %v613 = vpop.f32.mrb[0].mxu0
          %v614 = vpop.f32.mrb[0].mxu0
          %615 = vdwg.mxu0
          %v616 = vpack.c.bf16 %v611, %v611
          %v617 = vld [vmem:[%s5] sm:$0xf]
          %vm618 = vcmask 64512
          %v620 = vsel %vm618, %v616, 0
          %vm622 = vcmask 1043456
          %v624 = vsel %vm622, %v617, 0
          %626 = vmatprep.subr.bf16.mxu0 0
          %627 = vmatpush1.bf16.msra.mxu0 %v624
          %628 = vmatprep.subr.bf16.mxu0 0
          %629 = vmatpush1.bf16.msra.mxu0 0
          %630 = vmatprep.subr.bf16.mxu0 0
          %631 = vmatpush1.bf16.msra.mxu0 0
          %632 = vmatprep.subr.bf16.mxu0 0
          %633 = vmatpush1.bf16.msra.mxu0 0
          %634 = vmatprep.subr.bf16.mxu0 0
          %635 = vmatpush1.bf16.msra.mxu0 0
          %636 = vmatprep.subr.bf16.mxu0 0
          %637 = vmatpush1.bf16.msra.mxu0 0
          %638 = vmatprep.subr.bf16.mxu0 0
          %639 = vmatpush1.bf16.msra.mxu0 0
          %640 = vmatprep.subr.bf16.mxu0 0
          %641 = vmatpush1.bf16.msra.mxu0 0
          %642 = vmatprep.subr.bf16.mxu0 0
          %643 = vmatpush1.bf16.msra.mxu0 0
          %644 = vmatprep.subr.bf16.mxu0 0
          %645 = vmatpush1.bf16.msra.mxu0 0
          %646 = vmatprep.subr.bf16.mxu0 0
          %647 = vmatpush1.bf16.msra.mxu0 0
          %648 = vmatprep.subr.bf16.mxu0 0
          %649 = vmatpush1.bf16.msra.mxu0 0
          %650 = vmatprep.subr.bf16.mxu0 0
          %651 = vmatpush1.bf16.msra.mxu0 0
          %652 = vmatprep.subr.bf16.mxu0 0
          %653 = vmatpush1.bf16.msra.mxu0 0
          %654 = vmatprep.subr.bf16.mxu0 0
          %655 = vmatpush1.bf16.msra.mxu0 0
          %656 = vmatprep.subr.bf16.mxu0 0
          %657 = vmatpush1.bf16.msra.mxu0 0
          %658 = vmatprep.mubr.bf16.mxu0 0
          %659 = vmatmul.mubr.bf16.gmra.mrb[0].mxu0 %v620
          %v660 = vpop.f32.mrb[0].mxu0
          %v661 = vadd.f32 0.0, %v660
          %v662 = vpop.f32.mrb[0].mxu0
          %v663 = vpop.f32.mrb[0].mxu0
          %v664 = vpop.f32.mrb[0].mxu0
          %665 = vdwg.mxu0
          %s666 = scalar_lea.vmem %s5, 4
          %v667 = vld [vmem:[%s666] sm:$0xf]
          %669 = vrot.lane.b32.xlu0 %v616, 120
          %v670 = vpop.permute.xlu0 %669
          %v672 = vsel %vm618, %v670, 0
          %v675 = vsel %vm622, %v667, 0
          %677 = vmatprep.subr.bf16.mxu0 0
          %678 = vmatpush1.bf16.msra.mxu0 %v675
          %679 = vmatprep.subr.bf16.mxu0 0
          %680 = vmatpush1.bf16.msra.mxu0 0
          %681 = vmatprep.subr.bf16.mxu0 0
          %682 = vmatpush1.bf16.msra.mxu0 0
          %683 = vmatprep.subr.bf16.mxu0 0
          %684 = vmatpush1.bf16.msra.mxu0 0
          %685 = vmatprep.subr.bf16.mxu0 0
          %686 = vmatpush1.bf16.msra.mxu0 0
          %687 = vmatprep.subr.bf16.mxu0 0
          %688 = vmatpush1.bf16.msra.mxu0 0
          %689 = vmatprep.subr.bf16.mxu0 0
          %690 = vmatpush1.bf16.msra.mxu0 0
          %691 = vmatprep.subr.bf16.mxu0 0
          %692 = vmatpush1.bf16.msra.mxu0 0
          %693 = vmatprep.subr.bf16.mxu0 0
          %694 = vmatpush1.bf16.msra.mxu0 0
          %695 = vmatprep.subr.bf16.mxu0 0
          %696 = vmatpush1.bf16.msra.mxu0 0
          %697 = vmatprep.subr.bf16.mxu0 0
          %698 = vmatpush1.bf16.msra.mxu0 0
          %699 = vmatprep.subr.bf16.mxu0 0
          %700 = vmatpush1.bf16.msra.mxu0 0
          %701 = vmatprep.subr.bf16.mxu0 0
          %702 = vmatpush1.bf16.msra.mxu0 0
          %703 = vmatprep.subr.bf16.mxu0 0
          %704 = vmatpush1.bf16.msra.mxu0 0
          %705 = vmatprep.subr.bf16.mxu0 0
          %706 = vmatpush1.bf16.msra.mxu0 0
          %707 = vmatprep.subr.bf16.mxu0 0
          %708 = vmatpush1.bf16.msra.mxu0 0
          %709 = vmatprep.mubr.bf16.mxu0 0
          %710 = vmatmul.mubr.bf16.gmra.mrb[0].mxu0 %v672
          %v711 = vpop.f32.mrb[0].mxu0
          %v712 = vadd.f32 0.0, %v711
          %v713 = vpop.f32.mrb[0].mxu0
          %v714 = vpop.f32.mrb[0].mxu0
          %v715 = vpop.f32.mrb[0].mxu0
          %716 = vdwg.mxu0
          %s717 = scalar_lea.vmem %s5, 8
          %v718 = vld [vmem:[%s717] sm:$0xf]
          %719 = vrot.lane.b32.xlu0 %v616, 112
          %v720 = vpop.permute.xlu0 %719
          %v722 = vsel %vm618, %v720, 0
          %v725 = vsel %vm622, %v718, 0
          %727 = vmatprep.subr.bf16.mxu0 0
          %728 = vmatpush1.bf16.msra.mxu0 %v725
          %729 = vmatprep.subr.bf16.mxu0 0
          %730 = vmatpush1.bf16.msra.mxu0 0
          %731 = vmatprep.subr.bf16.mxu0 0
          %732 = vmatpush1.bf16.msra.mxu0 0
          %733 = vmatprep.subr.bf16.mxu0 0
          %734 = vmatpush1.bf16.msra.mxu0 0
          %735 = vmatprep.subr.bf16.mxu0 0
          %736 = vmatpush1.bf16.msra.mxu0 0
          %737 = vmatprep.subr.bf16.mxu0 0
          %738 = vmatpush1.bf16.msra.mxu0 0
          %739 = vmatprep.subr.bf16.mxu0 0
          %740 = vmatpush1.bf16.msra.mxu0 0
          %741 = vmatprep.subr.bf16.mxu0 0
          %742 = vmatpush1.bf16.msra.mxu0 0
          %743 = vmatprep.subr.bf16.mxu0 0
          %744 = vmatpush1.bf16.msra.mxu0 0
          %745 = vmatprep.subr.bf16.mxu0 0
          %746 = vmatpush1.bf16.msra.mxu0 0
          %747 = vmatprep.subr.bf16.mxu0 0
          %748 = vmatpush1.bf16.msra.mxu0 0
          %749 = vmatprep.subr.bf16.mxu0 0
          %750 = vmatpush1.bf16.msra.mxu0 0
          %751 = vmatprep.subr.bf16.mxu0 0
          %752 = vmatpush1.bf16.msra.mxu0 0
          %753 = vmatprep.subr.bf16.mxu0 0
          %754 = vmatpush1.bf16.msra.mxu0 0
          %755 = vmatprep.subr.bf16.mxu0 0
          %756 = vmatpush1.bf16.msra.mxu0 0
          %757 = vmatprep.subr.bf16.mxu0 0
          %758 = vmatpush1.bf16.msra.mxu0 0
          %759 = vmatprep.mubr.bf16.mxu0 0
          %760 = vmatmul.mubr.bf16.gmra.mrb[0].mxu0 %v722
          %v761 = vpop.f32.mrb[0].mxu0
          %v762 = vadd.f32 0.0, %v761
          %v763 = vpop.f32.mrb[0].mxu0
          %v764 = vpop.f32.mrb[0].mxu0
          %v765 = vpop.f32.mrb[0].mxu0
          %766 = vdwg.mxu0
          %s767 = scalar_lea.vmem %s5, 12
          %v768 = vld [vmem:[%s767] sm:$0xf]
          %769 = vrot.lane.b32.xlu0 %v616, 104
          %v770 = vpop.permute.xlu0 %769
          %v772 = vsel %vm618, %v770, 0
          %v775 = vsel %vm622, %v768, 0
          %777 = vmatprep.subr.bf16.mxu0 0
          %778 = vmatpush1.bf16.msra.mxu0 %v775
          %779 = vmatprep.subr.bf16.mxu0 0
          %780 = vmatpush1.bf16.msra.mxu0 0
          %781 = vmatprep.subr.bf16.mxu0 0
          %782 = vmatpush1.bf16.msra.mxu0 0
          %783 = vmatprep.subr.bf16.mxu0 0
          %784 = vmatpush1.bf16.msra.mxu0 0
          %785 = vmatprep.subr.bf16.mxu0 0
          %786 = vmatpush1.bf16.msra.mxu0 0
          %787 = vmatprep.subr.bf16.mxu0 0
          %788 = vmatpush1.bf16.msra.mxu0 0
          %789 = vmatprep.subr.bf16.mxu0 0
          %790 = vmatpush1.bf16.msra.mxu0 0
          %791 = vmatprep.subr.bf16.mxu0 0
          %792 = vmatpush1.bf16.msra.mxu0 0
          %793 = vmatprep.subr.bf16.mxu0 0
          %794 = vmatpush1.bf16.msra.mxu0 0
          %795 = vmatprep.subr.bf16.mxu0 0
          %796 = vmatpush1.bf16.msra.mxu0 0
          %797 = vmatprep.subr.bf16.mxu0 0
          %798 = vmatpush1.bf16.msra.mxu0 0
          %799 = vmatprep.subr.bf16.mxu0 0
          %800 = vmatpush1.bf16.msra.mxu0 0
          %801 = vmatprep.subr.bf16.mxu0 0
          %802 = vmatpush1.bf16.msra.mxu0 0
          %803 = vmatprep.subr.bf16.mxu0 0
          %804 = vmatpush1.bf16.msra.mxu0 0
          %805 = vmatprep.subr.bf16.mxu0 0
          %806 = vmatpush1.bf16.msra.mxu0 0
          %807 = vmatprep.subr.bf16.mxu0 0
          %808 = vmatpush1.bf16.msra.mxu0 0
          %809 = vmatprep.mubr.bf16.mxu0 0
          %810 = vmatmul.mubr.bf16.gmra.mrb[0].mxu0 %v772
          %v811 = vpop.f32.mrb[0].mxu0
          %v812 = vadd.f32 0.0, %v811
          %v813 = vpop.f32.mrb[0].mxu0
          %v814 = vpop.f32.mrb[0].mxu0
          %v815 = vpop.f32.mrb[0].mxu0
          %816 = vdwg.mxu0
          %s817 = sld [smem:[#allocation15]]
          %v818 = vstv %s817
          %v819 = vmul.f32 %v818, %v661
          %s820 = sld [smem:[#allocation15 + $0x80]]
          %v821 = vstv %s820
          %v822 = vmul.f32 %v821, %v712
          %v823 = vadd.f32 %v819, %v822
          %s824 = sld [smem:[#allocation15 + $0x100]]
          %v825 = vstv %s824
          %v826 = vmul.f32 %v825, %v762
          %v827 = vadd.f32 %v823, %v826
          %s828 = sld [smem:[#allocation15 + $0x180]]
          %v829 = vstv %s828
          %v830 = vmul.f32 %v829, %v812
          %v831 = vadd.f32 %v827, %v830
          %v832 = vpack.c.bf16 %v831, %v831
          %vm833 = vcmask 257024
          %834 = vst.msk [vmem:[#allocation3] sm:$0xf] %vm833, %v832
          %s835 = sld [smem:[#allocation15 + $0x1]]
          %v836 = vstv %s835
          %v837 = vmul.f32 %v836, %v661
          %s838 = sld [smem:[#allocation15 + $0x81]]
          %v839 = vstv %s838
          %v840 = vmul.f32 %v839, %v712
          %v841 = vadd.f32 %v837, %v840
          %s842 = sld [smem:[#allocation15 + $0x101]]
          %v843 = vstv %s842
          %v844 = vmul.f32 %v843, %v762
          %v845 = vadd.f32 %v841, %v844
          %s846 = sld [smem:[#allocation15 + $0x181]]
          %v847 = vstv %s846
          %v848 = vmul.f32 %v847, %v812
          %v849 = vadd.f32 %v845, %v848
          %v850 = vpack.c.bf16 %v849, %v849
          %s851 = scalar_lea.vmem [#allocation3], 4
          %852 = vst.msk [vmem:[%s851] sm:$0xf] %vm833, %v850
          %s853 = sld [smem:[#allocation15 + $0x2]]
          %v854 = vstv %s853
          %v855 = vmul.f32 %v854, %v661
          %s856 = sld [smem:[#allocation15 + $0x82]]
          %v857 = vstv %s856
          %v858 = vmul.f32 %v857, %v712
          %v859 = vadd.f32 %v855, %v858
          %s860 = sld [smem:[#allocation15 + $0x102]]
          %v861 = vstv %s860
          %v862 = vmul.f32 %v861, %v762
          %v863 = vadd.f32 %v859, %v862
          %s864 = sld [smem:[#allocation15 + $0x182]]
          %v865 = vstv %s864
          %v866 = vmul.f32 %v865, %v812
          %v867 = vadd.f32 %v863, %v866
          %v868 = vpack.c.bf16 %v867, %v867
          %s869 = scalar_lea.vmem [#allocation3], 8
          %870 = vst.msk [vmem:[%s869] sm:$0xf] %vm833, %v868
          %s871 = sld [smem:[#allocation15 + $0x3]]
          %v872 = vstv %s871
          %v873 = vmul.f32 %v872, %v661
          %s874 = sld [smem:[#allocation15 + $0x83]]
          %v875 = vstv %s874
          %v876 = vmul.f32 %v875, %v712
          %v877 = vadd.f32 %v873, %v876
          %s878 = sld [smem:[#allocation15 + $0x103]]
          %v879 = vstv %s878
          %v880 = vmul.f32 %v879, %v762
          %v881 = vadd.f32 %v877, %v880
          %s882 = sld [smem:[#allocation15 + $0x183]]
          %v883 = vstv %s882
          %v884 = vmul.f32 %v883, %v812
          %v885 = vadd.f32 %v881, %v884
          %v886 = vpack.c.bf16 %v885, %v885
          %s887 = scalar_lea.vmem [#allocation3], 12
          %888 = vst.msk [vmem:[%s887] sm:$0xf] %vm833, %v886
        $region88: #{tpu_custom_call.1} parent=55 // pred_fallthru
          _
        %v889 = vld [vmem:[%s402] sm:$0xf]
        %v890 = vld [vmem:[#allocation10] sm:$0xf]
        %v891 = vld [vmem:[#allocation10 + $0x4] sm:$0xf]
        %v892 = vld [vmem:[#allocation10 + $0x8] sm:$0xf]
        %v893 = vld [vmem:[#allocation10 + $0xc] sm:$0xf]
        %v898 = vunpack.c.l.b16 %v890
        %v899 = vunpack.c.l.b16 %v891
        %v900 = vunpack.c.l.b16 %v892
        %v901 = vunpack.c.l.b16 %v893
        %v902 = vpack.c.b16 %v899, %v898
        %v903 = vpack.c.b16 %v901, %v900
        %vm906 = vcmask 261120
        %v908 = vsel %vm906, %v889, 0
        %910 = vmatprep.subr.bf16.mxu0 0
        %911 = vmatpush1.bf16.msra.mxu0 %v902
        %912 = vmatprep.subr.bf16.mxu0 0
        %913 = vmatpush1.bf16.msra.mxu0 %v903
        %914 = vmatprep.subr.bf16.mxu0 0
        %915 = vmatpush1.bf16.msra.mxu0 0
        %916 = vmatprep.subr.bf16.mxu0 0
        %917 = vmatpush1.bf16.msra.mxu0 0
        %918 = vmatprep.subr.bf16.mxu0 0
        %919 = vmatpush1.bf16.msra.mxu0 0
        %920 = vmatprep.subr.bf16.mxu0 0
        %921 = vmatpush1.bf16.msra.mxu0 0
        %922 = vmatprep.subr.bf16.mxu0 0
        %923 = vmatpush1.bf16.msra.mxu0 0
        %924 = vmatprep.subr.bf16.mxu0 0
        %925 = vmatpush1.bf16.msra.mxu0 0
        %926 = vmatprep.subr.bf16.mxu0 0
        %927 = vmatpush1.bf16.msra.mxu0 0
        %928 = vmatprep.subr.bf16.mxu0 0
        %929 = vmatpush1.bf16.msra.mxu0 0
        %930 = vmatprep.subr.bf16.mxu0 0
        %931 = vmatpush1.bf16.msra.mxu0 0
        %932 = vmatprep.subr.bf16.mxu0 0
        %933 = vmatpush1.bf16.msra.mxu0 0
        %934 = vmatprep.subr.bf16.mxu0 0
        %935 = vmatpush1.bf16.msra.mxu0 0
        %936 = vmatprep.subr.bf16.mxu0 0
        %937 = vmatpush1.bf16.msra.mxu0 0
        %938 = vmatprep.subr.bf16.mxu0 0
        %939 = vmatpush1.bf16.msra.mxu0 0
        %940 = vmatprep.subr.bf16.mxu0 0
        %941 = vmatpush1.bf16.msra.mxu0 0
        %942 = vmatprep.mubr.bf16.mxu0 0
        %943 = vmatmul.mubr.bf16.gmra.mrb[0].mxu0 %v908
        %v944 = vpop.f32.mrb[0].mxu0
        %v945 = vadd.f32 0.0, %v944
        %v946 = vpop.f32.mrb[0].mxu0
        %v947 = vpop.f32.mrb[0].mxu0
        %v948 = vpop.f32.mrb[0].mxu0
        %949 = vdwg.mxu0
        %v950 = vpack.c.bf16 %v945, %v945
        %v951 = vld [vmem:[#allocation2] sm:$0xf]
        %vm952 = vcmask 64512
        %v954 = vsel %vm952, %v950, 0
        %vm956 = vcmask 1043456
        %v958 = vsel %vm956, %v951, 0
        %960 = vmatprep.subr.bf16.mxu0 0
        %961 = vmatpush1.bf16.msra.mxu0 %v958
        %962 = vmatprep.subr.bf16.mxu0 0
        %963 = vmatpush1.bf16.msra.mxu0 0
        %964 = vmatprep.subr.bf16.mxu0 0
        %965 = vmatpush1.bf16.msra.mxu0 0
        %966 = vmatprep.subr.bf16.mxu0 0
        %967 = vmatpush1.bf16.msra.mxu0 0
        %968 = vmatprep.subr.bf16.mxu0 0
        %969 = vmatpush1.bf16.msra.mxu0 0
        %970 = vmatprep.subr.bf16.mxu0 0
        %971 = vmatpush1.bf16.msra.mxu0 0
        %972 = vmatprep.subr.bf16.mxu0 0
        %973 = vmatpush1.bf16.msra.mxu0 0
        %974 = vmatprep.subr.bf16.mxu0 0
        %975 = vmatpush1.bf16.msra.mxu0 0
        %976 = vmatprep.subr.bf16.mxu0 0
        %977 = vmatpush1.bf16.msra.mxu0 0
        %978 = vmatprep.subr.bf16.mxu0 0
        %979 = vmatpush1.bf16.msra.mxu0 0
        %980 = vmatprep.subr.bf16.mxu0 0
        %981 = vmatpush1.bf16.msra.mxu0 0
        %982 = vmatprep.subr.bf16.mxu0 0
        %983 = vmatpush1.bf16.msra.mxu0 0
        %984 = vmatprep.subr.bf16.mxu0 0
        %985 = vmatpush1.bf16.msra.mxu0 0
        %986 = vmatprep.subr.bf16.mxu0 0
        %987 = vmatpush1.bf16.msra.mxu0 0
        %988 = vmatprep.subr.bf16.mxu0 0
        %989 = vmatpush1.bf16.msra.mxu0 0
        %990 = vmatprep.subr.bf16.mxu0 0
        %991 = vmatpush1.bf16.msra.mxu0 0
        %992 = vmatprep.mubr.bf16.mxu0 0
        %993 = vmatmul.mubr.bf16.gmra.mrb[0].mxu0 %v954
        %v994 = vpop.f32.mrb[0].mxu0
        %v995 = vadd.f32 0.0, %v994
        %v996 = vpop.f32.mrb[0].mxu0
        %v997 = vpop.f32.mrb[0].mxu0
        %v998 = vpop.f32.mrb[0].mxu0
        %999 = vdwg.mxu0
        %s1000 = scalar_lea.vmem [#allocation2], 4
        %v1001 = vld [vmem:[%s1000] sm:$0xf]
        %1003 = vrot.lane.b32.xlu0 %v950, 120
        %v1004 = vpop.permute.xlu0 %1003
        %v1006 = vsel %vm952, %v1004, 0
        %v1009 = vsel %vm956, %v1001, 0
        %1011 = vmatprep.subr.bf16.mxu0 0
        %1012 = vmatpush1.bf16.msra.mxu0 %v1009
        %1013 = vmatprep.subr.bf16.mxu0 0
        %1014 = vmatpush1.bf16.msra.mxu0 0
        %1015 = vmatprep.subr.bf16.mxu0 0
        %1016 = vmatpush1.bf16.msra.mxu0 0
        %1017 = vmatprep.subr.bf16.mxu0 0
        %1018 = vmatpush1.bf16.msra.mxu0 0
        %1019 = vmatprep.subr.bf16.mxu0 0
        %1020 = vmatpush1.bf16.msra.mxu0 0
        %1021 = vmatprep.subr.bf16.mxu0 0
        %1022 = vmatpush1.bf16.msra.mxu0 0
        %1023 = vmatprep.subr.bf16.mxu0 0
        %1024 = vmatpush1.bf16.msra.mxu0 0
        %1025 = vmatprep.subr.bf16.mxu0 0
        %1026 = vmatpush1.bf16.msra.mxu0 0
        %1027 = vmatprep.subr.bf16.mxu0 0
        %1028 = vmatpush1.bf16.msra.mxu0 0
        %1029 = vmatprep.subr.bf16.mxu0 0
        %1030 = vmatpush1.bf16.msra.mxu0 0
        %1031 = vmatprep.subr.bf16.mxu0 0
        %1032 = vmatpush1.bf16.msra.mxu0 0
        %1033 = vmatprep.subr.bf16.mxu0 0
        %1034 = vmatpush1.bf16.msra.mxu0 0
        %1035 = vmatprep.subr.bf16.mxu0 0
        %1036 = vmatpush1.bf16.msra.mxu0 0
        %1037 = vmatprep.subr.bf16.mxu0 0
        %1038 = vmatpush1.bf16.msra.mxu0 0
        %1039 = vmatprep.subr.bf16.mxu0 0
        %1040 = vmatpush1.bf16.msra.mxu0 0
        %1041 = vmatprep.subr.bf16.mxu0 0
        %1042 = vmatpush1.bf16.msra.mxu0 0
        %1043 = vmatprep.mubr.bf16.mxu0 0
        %1044 = vmatmul.mubr.bf16.gmra.mrb[0].mxu0 %v1006
        %v1045 = vpop.f32.mrb[0].mxu0
        %v1046 = vadd.f32 0.0, %v1045
        %v1047 = vpop.f32.mrb[0].mxu0
        %v1048 = vpop.f32.mrb[0].mxu0
        %v1049 = vpop.f32.mrb[0].mxu0
        %1050 = vdwg.mxu0
        %s1051 = scalar_lea.vmem [#allocation2], 8
        %v1052 = vld [vmem:[%s1051] sm:$0xf]
        %1053 = vrot.lane.b32.xlu0 %v950, 112
        %v1054 = vpop.permute.xlu0 %1053
        %v1056 = vsel %vm952, %v1054, 0
        %v1059 = vsel %vm956, %v1052, 0
        %1061 = vmatprep.subr.bf16.mxu0 0
        %1062 = vmatpush1.bf16.msra.mxu0 %v1059
        %1063 = vmatprep.subr.bf16.mxu0 0
        %1064 = vmatpush1.bf16.msra.mxu0 0
        %1065 = vmatprep.subr.bf16.mxu0 0
        %1066 = vmatpush1.bf16.msra.mxu0 0
        %1067 = vmatprep.subr.bf16.mxu0 0
        %1068 = vmatpush1.bf16.msra.mxu0 0
        %1069 = vmatprep.subr.bf16.mxu0 0
        %1070 = vmatpush1.bf16.msra.mxu0 0
        %1071 = vmatprep.subr.bf16.mxu0 0
        %1072 = vmatpush1.bf16.msra.mxu0 0
        %1073 = vmatprep.subr.bf16.mxu0 0
        %1074 = vmatpush1.bf16.msra.mxu0 0
        %1075 = vmatprep.subr.bf16.mxu0 0
        %1076 = vmatpush1.bf16.msra.mxu0 0
        %1077 = vmatprep.subr.bf16.mxu0 0
        %1078 = vmatpush1.bf16.msra.mxu0 0
        %1079 = vmatprep.subr.bf16.mxu0 0
        %1080 = vmatpush1.bf16.msra.mxu0 0
        %1081 = vmatprep.subr.bf16.mxu0 0
        %1082 = vmatpush1.bf16.msra.mxu0 0
        %1083 = vmatprep.subr.bf16.mxu0 0
        %1084 = vmatpush1.bf16.msra.mxu0 0
        %1085 = vmatprep.subr.bf16.mxu0 0
        %1086 = vmatpush1.bf16.msra.mxu0 0
        %1087 = vmatprep.subr.bf16.mxu0 0
        %1088 = vmatpush1.bf16.msra.mxu0 0
        %1089 = vmatprep.subr.bf16.mxu0 0
        %1090 = vmatpush1.bf16.msra.mxu0 0
        %1091 = vmatprep.subr.bf16.mxu0 0
        %1092 = vmatpush1.bf16.msra.mxu0 0
        %1093 = vmatprep.mubr.bf16.mxu0 0
        %1094 = vmatmul.mubr.bf16.gmra.mrb[0].mxu0 %v1056
        %v1095 = vpop.f32.mrb[0].mxu0
        %v1096 = vadd.f32 0.0, %v1095
        %v1097 = vpop.f32.mrb[0].mxu0
        %v1098 = vpop.f32.mrb[0].mxu0
        %v1099 = vpop.f32.mrb[0].mxu0
        %1100 = vdwg.mxu0
        %s1101 = scalar_lea.vmem [#allocation2], 12
        %v1102 = vld [vmem:[%s1101] sm:$0xf]
        %1103 = vrot.lane.b32.xlu0 %v950, 104
        %v1104 = vpop.permute.xlu0 %1103
        %v1106 = vsel %vm952, %v1104, 0
        %v1109 = vsel %vm956, %v1102, 0
        %1111 = vmatprep.subr.bf16.mxu0 0
        %1112 = vmatpush1.bf16.msra.mxu0 %v1109
        %1113 = vmatprep.subr.bf16.mxu0 0
        %1114 = vmatpush1.bf16.msra.mxu0 0
        %1115 = vmatprep.subr.bf16.mxu0 0
        %1116 = vmatpush1.bf16.msra.mxu0 0
        %1117 = vmatprep.subr.bf16.mxu0 0
        %1118 = vmatpush1.bf16.msra.mxu0 0
        %1119 = vmatprep.subr.bf16.mxu0 0
        %1120 = vmatpush1.bf16.msra.mxu0 0
        %1121 = vmatprep.subr.bf16.mxu0 0
        %1122 = vmatpush1.bf16.msra.mxu0 0
        %1123 = vmatprep.subr.bf16.mxu0 0
        %1124 = vmatpush1.bf16.msra.mxu0 0
        %1125 = vmatprep.subr.bf16.mxu0 0
        %1126 = vmatpush1.bf16.msra.mxu0 0
        %1127 = vmatprep.subr.bf16.mxu0 0
        %1128 = vmatpush1.bf16.msra.mxu0 0
        %1129 = vmatprep.subr.bf16.mxu0 0
        %1130 = vmatpush1.bf16.msra.mxu0 0
        %1131 = vmatprep.subr.bf16.mxu0 0
        %1132 = vmatpush1.bf16.msra.mxu0 0
        %1133 = vmatprep.subr.bf16.mxu0 0
        %1134 = vmatpush1.bf16.msra.mxu0 0
        %1135 = vmatprep.subr.bf16.mxu0 0
        %1136 = vmatpush1.bf16.msra.mxu0 0
        %1137 = vmatprep.subr.bf16.mxu0 0
        %1138 = vmatpush1.bf16.msra.mxu0 0
        %1139 = vmatprep.subr.bf16.mxu0 0
        %1140 = vmatpush1.bf16.msra.mxu0 0
        %1141 = vmatprep.subr.bf16.mxu0 0
        %1142 = vmatpush1.bf16.msra.mxu0 0
        %1143 = vmatprep.mubr.bf16.mxu0 0
        %1144 = vmatmul.mubr.bf16.gmra.mrb[0].mxu0 %v1106
        %v1145 = vpop.f32.mrb[0].mxu0
        %v1146 = vadd.f32 0.0, %v1145
        %v1147 = vpop.f32.mrb[0].mxu0
        %v1148 = vpop.f32.mrb[0].mxu0
        %v1149 = vpop.f32.mrb[0].mxu0
        %1150 = vdwg.mxu0
        %s1151 = sld [smem:[#allocation14]]
        %v1152 = vstv %s1151
        %v1153 = vmul.f32 %v1152, %v995
        %s1154 = sld [smem:[#allocation14 + $0x1]]
        %v1155 = vstv %s1154
        %v1156 = vmul.f32 %v1155, %v1046
        %v1157 = vadd.f32 %v1153, %v1156
        %s1158 = sld [smem:[#allocation14 + $0x2]]
        %v1159 = vstv %s1158
        %v1160 = vmul.f32 %v1159, %v1096
        %v1161 = vadd.f32 %v1157, %v1160
        %s1162 = sld [smem:[#allocation14 + $0x3]]
        %v1163 = vstv %s1162
        %v1164 = vmul.f32 %v1163, %v1146
        %v1165 = vadd.f32 %v1161, %v1164
        %v1166 = vsel %vm952, %v1165, -inf
        %1167 = vmax.xlane.f32.xlu0 %v1166
        %v1168 = vpop.xlane.xlu0 %1167
        %v1169 = vsub.f32 %v1165, %v1168
        %v1170 = vmul.f32 %v1169, 1.442695
        %v1171 = vpow.pop %v1170
        %v1172 = vsel %vm952, %v1171, 0.0
        %1173 = vadd.xlane.f32.xlu0 %v1172
        %v1174 = vpop.xlane.xlu0 %1173
        %v1175 = vrcp.pop %v1174
        %v1176 = vmul.f32 %v1171, %v1175
        %v1177 = vpack.c.bf16 %v1176, %v1176
        %v1178 = vld [vmem:[#allocation3] sm:$0xf]
        %s1179 = sld [smem:[#allocation14 + $0x80]]
        %v1180 = vstv %s1179
        %v1181 = vmul.f32 %v1180, %v995
        %s1182 = sld [smem:[#allocation14 + $0x81]]
        %v1183 = vstv %s1182
        %v1184 = vmul.f32 %v1183, %v1046
        %v1185 = vadd.f32 %v1181, %v1184
        %s1186 = sld [smem:[#allocation14 + $0x82]]
        %v1187 = vstv %s1186
        %v1188 = vmul.f32 %v1187, %v1096
        %v1189 = vadd.f32 %v1185, %v1188
        %s1190 = sld [smem:[#allocation14 + $0x83]]
        %v1191 = vstv %s1190
        %v1192 = vmul.f32 %v1191, %v1146
        %v1193 = vadd.f32 %v1189, %v1192
        %v1194 = vsel %vm952, %v1193, -inf
        %1195 = vmax.xlane.f32.xlu0 %v1194
        %v1196 = vpop.xlane.xlu0 %1195
        %v1197 = vsub.f32 %v1193, %v1196
        %v1198 = vmul.f32 %v1197, 1.442695
        %v1199 = vpow.pop %v1198
        %v1200 = vsel %vm952, %v1199, 0.0
        %1201 = vadd.xlane.f32.xlu0 %v1200
        %v1202 = vpop.xlane.xlu0 %1201
        %v1203 = vrcp.pop %v1202
        %v1204 = vmul.f32 %v1199, %v1203
        %v1205 = vpack.c.bf16 %v1204, %v1204
        %s1206 = scalar_lea.vmem [#allocation3], 4
        %v1207 = vld [vmem:[%s1206] sm:$0xf]
        %v1209 = vsel %vm952, %v1205, 0
        %v1212 = vsel %vm956, %v1207, 0
        %1214 = vmatprep.subr.bf16.mxu0 0
        %1215 = vmatpush1.bf16.msra.mxu0 %v1212
        %1216 = vmatprep.subr.bf16.mxu0 0
        %1217 = vmatpush1.bf16.msra.mxu0 0
        %1218 = vmatprep.subr.bf16.mxu0 0
        %1219 = vmatpush1.bf16.msra.mxu0 0
        %1220 = vmatprep.subr.bf16.mxu0 0
        %1221 = vmatpush1.bf16.msra.mxu0 0
        %1222 = vmatprep.subr.bf16.mxu0 0
        %1223 = vmatpush1.bf16.msra.mxu0 0
        %1224 = vmatprep.subr.bf16.mxu0 0
        %1225 = vmatpush1.bf16.msra.mxu0 0
        %1226 = vmatprep.subr.bf16.mxu0 0
        %1227 = vmatpush1.bf16.msra.mxu0 0
        %1228 = vmatprep.subr.bf16.mxu0 0
        %1229 = vmatpush1.bf16.msra.mxu0 0
        %1230 = vmatprep.subr.bf16.mxu0 0
        %1231 = vmatpush1.bf16.msra.mxu0 0
        %1232 = vmatprep.subr.bf16.mxu0 0
        %1233 = vmatpush1.bf16.msra.mxu0 0
        %1234 = vmatprep.subr.bf16.mxu0 0
        %1235 = vmatpush1.bf16.msra.mxu0 0
        %1236 = vmatprep.subr.bf16.mxu0 0
        %1237 = vmatpush1.bf16.msra.mxu0 0
        %1238 = vmatprep.subr.bf16.mxu0 0
        %1239 = vmatpush1.bf16.msra.mxu0 0
        %1240 = vmatprep.subr.bf16.mxu0 0
        %1241 = vmatpush1.bf16.msra.mxu0 0
        %1242 = vmatprep.subr.bf16.mxu0 0
        %1243 = vmatpush1.bf16.msra.mxu0 0
        %1244 = vmatprep.subr.bf16.mxu0 0
        %1245 = vmatpush1.bf16.msra.mxu0 0
        %1246 = vmatprep.mubr.bf16.mxu0 0
        %1247 = vmatmul.mubr.bf16.gmra.mrb[0].mxu0 %v1209
        %v1248 = vpop.f32.mrb[0].mxu0
        %v1249 = vadd.f32 0.0, %v1248
        %v1250 = vpop.f32.mrb[0].mxu0
        %v1251 = vpop.f32.mrb[0].mxu0
        %v1252 = vpop.f32.mrb[0].mxu0
        %1253 = vdwg.mxu0
        %v1255 = vsel %vm952, %v1177, 0
        %v1258 = vsel %vm956, %v1178, 0
        %1260 = vmatprep.subr.bf16.mxu0 0
        %1261 = vmatpush1.bf16.msra.mxu0 %v1258
        %1262 = vmatprep.subr.bf16.mxu0 0
        %1263 = vmatpush1.bf16.msra.mxu0 0
        %1264 = vmatprep.subr.bf16.mxu0 0
        %1265 = vmatpush1.bf16.msra.mxu0 0
        %1266 = vmatprep.subr.bf16.mxu0 0
        %1267 = vmatpush1.bf16.msra.mxu0 0
        %1268 = vmatprep.subr.bf16.mxu0 0
        %1269 = vmatpush1.bf16.msra.mxu0 0
        %1270 = vmatprep.subr.bf16.mxu0 0
        %1271 = vmatpush1.bf16.msra.mxu0 0
        %1272 = vmatprep.subr.bf16.mxu0 0
        %1273 = vmatpush1.bf16.msra.mxu0 0
        %1274 = vmatprep.subr.bf16.mxu0 0
        %1275 = vmatpush1.bf16.msra.mxu0 0
        %1276 = vmatprep.subr.bf16.mxu0 0
        %1277 = vmatpush1.bf16.msra.mxu0 0
        %1278 = vmatprep.subr.bf16.mxu0 0
        %1279 = vmatpush1.bf16.msra.mxu0 0
        %1280 = vmatprep.subr.bf16.mxu0 0
        %1281 = vmatpush1.bf16.msra.mxu0 0
        %1282 = vmatprep.subr.bf16.mxu0 0
        %1283 = vmatpush1.bf16.msra.mxu0 0
        %1284 = vmatprep.subr.bf16.mxu0 0
        %1285 = vmatpush1.bf16.msra.mxu0 0
        %1286 = vmatprep.subr.bf16.mxu0 0
        %1287 = vmatpush1.bf16.msra.mxu0 0
        %1288 = vmatprep.subr.bf16.mxu0 0
        %1289 = vmatpush1.bf16.msra.mxu0 0
        %1290 = vmatprep.subr.bf16.mxu0 0
        %1291 = vmatpush1.bf16.msra.mxu0 0
        %1292 = vmatprep.mubr.bf16.mxu0 0
        %1293 = vmatmul.mubr.bf16.gmra.mrb[0].mxu0 %v1255
        %v1294 = vpop.f32.mrb[0].mxu0
        %v1295 = vadd.f32 %v1249, %v1294
        %v1296 = vpop.f32.mrb[0].mxu0
        %v1297 = vpop.f32.mrb[0].mxu0
        %v1298 = vpop.f32.mrb[0].mxu0
        %1299 = vdwg.mxu0
        %s1300 = sld [smem:[#allocation14 + $0x100]]
        %v1301 = vstv %s1300
        %v1302 = vmul.f32 %v1301, %v995
        %s1303 = sld [smem:[#allocation14 + $0x101]]
        %v1304 = vstv %s1303
        %v1305 = vmul.f32 %v1304, %v1046
        %v1306 = vadd.f32 %v1302, %v1305
        %s1307 = sld [smem:[#allocation14 + $0x102]]
        %v1308 = vstv %s1307
        %v1309 = vmul.f32 %v1308, %v1096
        %v1310 = vadd.f32 %v1306, %v1309
        %s1311 = sld [smem:[#allocation14 + $0x103]]
        %v1312 = vstv %s1311
        %v1313 = vmul.f32 %v1312, %v1146
        %v1314 = vadd.f32 %v1310, %v1313
        %v1315 = vsel %vm952, %v1314, -inf
        %1316 = vmax.xlane.f32.xlu0 %v1315
        %v1317 = vpop.xlane.xlu0 %1316
        %v1318 = vsub.f32 %v1314, %v1317
        %v1319 = vmul.f32 %v1318, 1.442695
        %v1320 = vpow.pop %v1319
        %v1321 = vsel %vm952, %v1320, 0.0
        %1322 = vadd.xlane.f32.xlu0 %v1321
        %v1323 = vpop.xlane.xlu0 %1322
        %v1324 = vrcp.pop %v1323
        %v1325 = vmul.f32 %v1320, %v1324
        %v1326 = vpack.c.bf16 %v1325, %v1325
        %s1327 = scalar_lea.vmem [#allocation3], 8
        %v1328 = vld [vmem:[%s1327] sm:$0xf]
        %v1330 = vsel %vm952, %v1326, 0
        %v1333 = vsel %vm956, %v1328, 0
        %1335 = vmatprep.subr.bf16.mxu0 0
        %1336 = vmatpush1.bf16.msra.mxu0 %v1333
        %1337 = vmatprep.subr.bf16.mxu0 0
        %1338 = vmatpush1.bf16.msra.mxu0 0
        %1339 = vmatprep.subr.bf16.mxu0 0
        %1340 = vmatpush1.bf16.msra.mxu0 0
        %1341 = vmatprep.subr.bf16.mxu0 0
        %1342 = vmatpush1.bf16.msra.mxu0 0
        %1343 = vmatprep.subr.bf16.mxu0 0
        %1344 = vmatpush1.bf16.msra.mxu0 0
        %1345 = vmatprep.subr.bf16.mxu0 0
        %1346 = vmatpush1.bf16.msra.mxu0 0
        %1347 = vmatprep.subr.bf16.mxu0 0
        %1348 = vmatpush1.bf16.msra.mxu0 0
        %1349 = vmatprep.subr.bf16.mxu0 0
        %1350 = vmatpush1.bf16.msra.mxu0 0
        %1351 = vmatprep.subr.bf16.mxu0 0
        %1352 = vmatpush1.bf16.msra.mxu0 0
        %1353 = vmatprep.subr.bf16.mxu0 0
        %1354 = vmatpush1.bf16.msra.mxu0 0
        %1355 = vmatprep.subr.bf16.mxu0 0
        %1356 = vmatpush1.bf16.msra.mxu0 0
        %1357 = vmatprep.subr.bf16.mxu0 0
        %1358 = vmatpush1.bf16.msra.mxu0 0
        %1359 = vmatprep.subr.bf16.mxu0 0
        %1360 = vmatpush1.bf16.msra.mxu0 0
        %1361 = vmatprep.subr.bf16.mxu0 0
        %1362 = vmatpush1.bf16.msra.mxu0 0
        %1363 = vmatprep.subr.bf16.mxu0 0
        %1364 = vmatpush1.bf16.msra.mxu0 0
        %1365 = vmatprep.subr.bf16.mxu0 0
        %1366 = vmatpush1.bf16.msra.mxu0 0
        %1367 = vmatprep.mubr.bf16.mxu0 0
        %1368 = vmatmul.mubr.bf16.gmra.mrb[0].mxu0 %v1330
        %v1369 = vpop.f32.mrb[0].mxu0
        %v1370 = vadd.f32 0.0, %v1369
        %v1371 = vpop.f32.mrb[0].mxu0
        %v1372 = vpop.f32.mrb[0].mxu0
        %v1373 = vpop.f32.mrb[0].mxu0
        %1374 = vdwg.mxu0
        %v1375 = vadd.f32 %v1295, %v1370
        %s1376 = sld [smem:[#allocation14 + $0x180]]
        %v1377 = vstv %s1376
        %v1378 = vmul.f32 %v1377, %v995
        %s1379 = sld [smem:[#allocation14 + $0x181]]
        %v1380 = vstv %s1379
        %v1381 = vmul.f32 %v1380, %v1046
        %v1382 = vadd.f32 %v1378, %v1381
        %s1383 = sld [smem:[#allocation14 + $0x182]]
        %v1384 = vstv %s1383
        %v1385 = vmul.f32 %v1384, %v1096
        %v1386 = vadd.f32 %v1382, %v1385
        %s1387 = sld [smem:[#allocation14 + $0x183]]
        %v1388 = vstv %s1387
        %v1389 = vmul.f32 %v1388, %v1146
        %v1390 = vadd.f32 %v1386, %v1389
        %v1391 = vsel %vm952, %v1390, -inf
        %1392 = vmax.xlane.f32.xlu0 %v1391
        %v1393 = vpop.xlane.xlu0 %1392
        %v1394 = vsub.f32 %v1390, %v1393
        %v1395 = vmul.f32 %v1394, 1.442695
        %v1396 = vpow.pop %v1395
        %v1397 = vsel %vm952, %v1396, 0.0
        %1398 = vadd.xlane.f32.xlu0 %v1397
        %v1399 = vpop.xlane.xlu0 %1398
        %v1400 = vrcp.pop %v1399
        %v1401 = vmul.f32 %v1396, %v1400
        %v1402 = vpack.c.bf16 %v1401, %v1401
        %s1403 = scalar_lea.vmem [#allocation3], 12
        %v1404 = vld [vmem:[%s1403] sm:$0xf]
        %v1406 = vsel %vm952, %v1402, 0
        %v1409 = vsel %vm956, %v1404, 0
        %1411 = vmatprep.subr.bf16.mxu0 0
        %1412 = vmatpush1.bf16.msra.mxu0 %v1409
        %1413 = vmatprep.subr.bf16.mxu0 0
        %1414 = vmatpush1.bf16.msra.mxu0 0
        %1415 = vmatprep.subr.bf16.mxu0 0
        %1416 = vmatpush1.bf16.msra.mxu0 0
        %1417 = vmatprep.subr.bf16.mxu0 0
        %1418 = vmatpush1.bf16.msra.mxu0 0
        %1419 = vmatprep.subr.bf16.mxu0 0
        %1420 = vmatpush1.bf16.msra.mxu0 0
        %1421 = vmatprep.subr.bf16.mxu0 0
        %1422 = vmatpush1.bf16.msra.mxu0 0
        %1423 = vmatprep.subr.bf16.mxu0 0
        %1424 = vmatpush1.bf16.msra.mxu0 0
        %1425 = vmatprep.subr.bf16.mxu0 0
        %1426 = vmatpush1.bf16.msra.mxu0 0
        %1427 = vmatprep.subr.bf16.mxu0 0
        %1428 = vmatpush1.bf16.msra.mxu0 0
        %1429 = vmatprep.subr.bf16.mxu0 0
        %1430 = vmatpush1.bf16.msra.mxu0 0
        %1431 = vmatprep.subr.bf16.mxu0 0
        %1432 = vmatpush1.bf16.msra.mxu0 0
        %1433 = vmatprep.subr.bf16.mxu0 0
        %1434 = vmatpush1.bf16.msra.mxu0 0
        %1435 = vmatprep.subr.bf16.mxu0 0
        %1436 = vmatpush1.bf16.msra.mxu0 0
        %1437 = vmatprep.subr.bf16.mxu0 0
        %1438 = vmatpush1.bf16.msra.mxu0 0
        %1439 = vmatprep.subr.bf16.mxu0 0
        %1440 = vmatpush1.bf16.msra.mxu0 0
        %1441 = vmatprep.subr.bf16.mxu0 0
        %1442 = vmatpush1.bf16.msra.mxu0 0
        %1443 = vmatprep.mubr.bf16.mxu0 0
        %1444 = vmatmul.mubr.bf16.gmra.mrb[0].mxu0 %v1406
        %v1445 = vpop.f32.mrb[0].mxu0
        %v1446 = vadd.f32 0.0, %v1445
        %v1447 = vpop.f32.mrb[0].mxu0
        %v1448 = vpop.f32.mrb[0].mxu0
        %v1449 = vpop.f32.mrb[0].mxu0
        %1450 = vdwg.mxu0
        %v1451 = vadd.f32 %v1375, %v1446
        %v1452 = vld [vmem:[%s6] sm:$0x1]
        %v1454 = vlaneseq
        %v1455 = vshrl.u32 %v1454, 7
        %v1456 = vsub.s32 0, %v1455
        %v1457 = vrot.slane %v1452, %v1456
        %v1459 = vadd.f32 %v1451, %v1457
        %1460 = vst.msk [vmem:[%s471] sm:$0xff] %vm906, %v1459
        %s1461 = sand.u32 %s255, 1
        %s1462 = scalar_lea.sflag [#allocation6], %s1461
        %s1463 = sand.u32 %s255, 1
        %s1464 = smul.addr %s1463, 8
        %s1465 = scalar_lea.vmem [#allocation17], %s1464
        // Predicated region
        $region89: #{tpu_custom_call.1} parent=55 // pred_check
          %p1466 = pneg %p265
        $region90: #{tpu_custom_call.1} parent=55 // pred_check_branch
          %1468 = sbr.rel (%p1466) target = $region92
        $region91: #{tpu_custom_call.1} parent=55 // pred_region
          %s1470 = ssub.s32 128, 128
          %1471 = vsyncadd %s1462, %s1470
          %s1472 = sadd.s32 %s37, %s36
          %s1473 = smul.addr %s1472, 128
          %s1474 = scalar_lea.hbm %s9, %s1473
          %s1476 = sshll.u32 %s1465, 4
          %s1477 = int_to_ptr.vmem [resolvable:$true] %s1476
          %1479 = dma.vmem_to_hbm [thread:$0]  %s1477, 128, %s1474, %s1462
        $region92: #{tpu_custom_call.1} parent=55 // pred_fallthru
          _
      $region56: #{tpu_custom_call.1} parent=5 // pred_fallthru
        _
      %p1480 = scmp.le.s32.totalorder 2, %s27
      // Predicated region
      $region93: #{tpu_custom_call.1} parent=5 // pred_check
        %p1481 = pneg %p1480
      $region94: #{tpu_custom_call.1} parent=5 // pred_check_branch
        %1483 = sbr.rel (%p1481) target = $region96
      $region95: #{tpu_custom_call.1} parent=5 // pred_region
        %s1484 = ssub.s32 %s27, 2
        // Predicated region
        $region97: #{tpu_custom_call.1} parent=95 // pred_check
          %p1485 = pneg %p271
        $region98: #{tpu_custom_call.1} parent=95 // pred_check_branch
          %1487 = sbr.rel (%p1485) target = $region100
        $region99: #{tpu_custom_call.1} parent=95 // pred_region
          %s1488 = sand.u32 %s256, 1
          %s1489 = scalar_lea.sflag [#allocation6], %s1488
          %s1490 = sand.u32 %s256, 1
          %s1491 = smul.addr %s1490, 8
          %s1492 = scalar_lea.vmem [#allocation17], %s1491
          %1493 = dma.done %s1489, 128
        $region100: #{tpu_custom_call.1} parent=95 // pred_fallthru
          _
      $region96: #{tpu_custom_call.1} parent=5 // pred_fallthru
        _
    $region6: #{tpu_custom_call.1} parent=1 // loop_footer
      %s31 = sadd.s32 1, %s27
    $region7: #{tpu_custom_call.1} parent=1 // loop_footer_branch
      %26 = sbr.rel target = $region3
    $region8: #{tpu_custom_call.1} parent=1 // loop_exit
      _
    %1494 = vsyncpa [#allocation5], 1
    %s1495 = scalar_lea.sflag [#allocation5], 1
    %1496 = vsyncpa %s1495, 1
    %1497 = vsyncpa [#allocation9], 1
    %s1498 = scalar_lea.sflag [#allocation9], 1
    %1499 = vsyncpa %s1498, 1
    %1500 = vsyncpa [#allocation12], 1
    %1501 = vsyncpa [#allocation6], 1
    %s1502 = scalar_lea.sflag [#allocation6], 1
    %1503 = vsyncpa %s1502, 1
    %1504 = vsyncpa [#allocation7], 1
    %s1505 = scalar_lea.sflag [#allocation7], 1
    %1506 = vsyncpa %s1505, 1
    %1507 = vsyncpa [#allocation16], 1

</llo_original>
